<compile_context>
chip_gen: v5e
topology: v5e:2x2
jax: 0.10.0
libtpu: 0.0.40
codegen_flags: <defaults>
</compile_context>

<pallas_src>
import math

import jax
import jax.numpy as jnp
from jax.experimental import pallas as pl
from jax.experimental.pallas import tpu as pltpu

IN_DIM = 28 * 28          # 784
IN_PAD = 7 * 128          # 896  (lane-aligned score width)
PROC_OUT = 64
PRED_OUT = 10
HID = 128
NEG_BIG = -1e9            # logits-pad bias: exp(NEG_BIG - m) underflows to 0

# ---- packed-weight slot indices (all (128, 128)) ----------------------------
_PW2, _PW3, _PW4 = 0, 1, 2
_CW2, _CW3, _CW4 = 3, 4, 5
_QW1, _QW2, _QW3, _QW4 = 6, 7, 8, 9
_QW4T, _QW3T, _QW2T, _QW1T = 10, 11, 12, 13
_PW4T, _PW3T, _PW2T = 14, 15, 16
_NUM_W = 17
# ---- packed-bias slot indices (all (1, 128)) --------------------------------
_PB1, _PB2, _PB3, _PB4 = 0, 1, 2, 3
_CW1, _CB1, _CB2, _CB3, _CB4 = 4, 5, 6, 7, 8
_QB1, _QB2, _QB3, _QB4 = 9, 10, 11, 12
_NUM_B = 13


def _make_kernel(mm_dtype):
    """Build the kernel for a given matmul operand dtype (bf16 or f32)."""

    def kernel(x_ref, sig_ref, pw1_ref, pw1t_ref, sbw_ref, sbb_ref, w_ref, b_ref,
               score_ref, logits_ref):
        f32 = jnp.float32

        def dense(h, wmat, brow):
            # operands in mm_dtype, accumulate + bias in f32
            return jnp.dot(h.astype(mm_dtype), wmat,
                           preferred_element_type=f32) + brow

        def back(g, wt):
            return jnp.dot(g.astype(mm_dtype), wt, preferred_element_type=f32)

        x = x_ref[...]                     # (TB, 784) f32
        sig = sig_ref[...]                 # (TB, 1)   f32

        # ---------------- forward: process MLP (784 -> 128^3 -> 128[pad]) ----
        a1 = dense(x, pw1_ref[...], b_ref[_PB1])
        h1 = jnp.maximum(a1, 0.0)
        a2 = dense(h1, w_ref[_PW2], b_ref[_PB2])
        h2 = jnp.maximum(a2, 0.0)
        a3 = dense(h2, w_ref[_PW3], b_ref[_PB3])
        h3 = jnp.maximum(a3, 0.0)
        processed = dense(h3, w_ref[_PW4], b_ref[_PB4])   # (TB,128), cols 64: == 0

        # ---------------- forward: condition MLP (1 -> 128^3 -> 128) ---------
        # first layer has K=1 -> broadcast multiply on the VPU (kept f32)
        c1 = jnp.maximum(sig * b_ref[_CW1] + b_ref[_CB1], 0.0)
        c2 = jnp.maximum(dense(c1, w_ref[_CW2], b_ref[_CB2]), 0.0)
        c3 = jnp.maximum(dense(c2, w_ref[_CW3], b_ref[_CB3]), 0.0)
        cond = dense(c3, w_ref[_CW4], b_ref[_CB4])         # (TB, 128)

        # fused scale|bias head: one lane-dense (128,256) matmul, vreg-boundary split
        sb = dense(cond, sbw_ref[...], sbb_ref[...])        # (TB, 256)
        scale = sb[:, :HID]                                 # (TB, 128), cols 64: == 0
        bias = sb[:, HID:]                                  # (TB, 128), cols 64: == 0

        u = processed * scale + bias                        # (TB, 128)

        # ---------------- forward: predict MLP (128[pad] -> 128^3 -> 128[pad])
        q1 = dense(u, w_ref[_QW1], b_ref[_QB1])
        g1 = jnp.maximum(q1, 0.0)
        q2 = dense(g1, w_ref[_QW2], b_ref[_QB2])
        g2 = jnp.maximum(q2, 0.0)
        q3 = dense(g2, w_ref[_QW3], b_ref[_QB3])
        g3 = jnp.maximum(q3, 0.0)
        logits = dense(g3, w_ref[_QW4], b_ref[_QB4])        # (TB,128), cols 10: == -1e9
        logits_ref[...] = logits                            # lane-dense store

        # ---------------- backward: score = d(-logsumexp(logits)) / d(x) -----
        m = jnp.max(logits, axis=1, keepdims=True)
        e = jnp.exp(logits - m)                             # pad lanes underflow to 0
        inv_denom = pl.reciprocal(jnp.sum(e, axis=1, keepdims=True), approx=False)
        d_logits = -(e * inv_denom)                         # (TB,128), pad lanes == 0

        d_g3 = back(d_logits, w_ref[_QW4T])
        d_q3 = jnp.where(q3 > 0.0, d_g3, 0.0)
        d_g2 = back(d_q3, w_ref[_QW3T])
        d_q2 = jnp.where(q2 > 0.0, d_g2, 0.0)
        d_g1 = back(d_q2, w_ref[_QW2T])
        d_q1 = jnp.where(q1 > 0.0, d_g1, 0.0)
        d_u = back(d_q1, w_ref[_QW1T])                      # (TB,128), cols 64: == 0

        # condition branch depends only on sigma -> no gradient path to x
        d_proc = d_u * scale

        d_h3 = back(d_proc, w_ref[_PW4T])
        d_a3 = jnp.where(a3 > 0.0, d_h3, 0.0)
        d_h2 = back(d_a3, w_ref[_PW3T])
        d_a2 = jnp.where(a2 > 0.0, d_h2, 0.0)
        d_h1 = back(d_a2, w_ref[_PW2T])
        d_a1 = jnp.where(a1 > 0.0, d_h1, 0.0)
        score_ref[...] = back(d_a1, pw1t_ref[...])          # (TB,896), cols 784: == 0

    return kernel


# ----------------------------------------------------------------------------
# Parameter construction (deterministic, PyTorch-Linear-style uniform init)
# ----------------------------------------------------------------------------
_LAYER_DIMS = (
    # process
    (IN_DIM, HID), (HID, HID), (HID, HID), (HID, PROC_OUT),
    # condition
    (1, HID), (HID, HID), (HID, HID), (HID, HID),
    # scale, bias
    (HID, PROC_OUT), (HID, PROC_OUT),
    # predict
    (PROC_OUT, HID), (HID, HID), (HID, HID), (HID, PRED_OUT),
)


def init_params(key):
    params = []
    keys = jax.random.split(key, len(_LAYER_DIMS))
    for k, (fan_in, fan_out) in zip(keys, _LAYER_DIMS):
        kw, kb = jax.random.split(k)
        bound = 1.0 / math.sqrt(fan_in)
        w = jax.random.uniform(kw, (fan_in, fan_out), jnp.float32, -bound, bound)
        b = jax.random.uniform(kb, (1, fan_out), jnp.float32, -bound, bound)
        params.append(w)
        params.append(b)
    return params


def _pad_cols(a, cols, fill=0.0):
    return jnp.pad(a, ((0, 0), (0, cols - a.shape[1])), constant_values=fill)


def _pad_rows(a, rows):
    return jnp.pad(a, ((0, rows - a.shape[0]), (0, 0)))


def _prepare_kernel_params(params, mm_dtype):
    """Pad, fuse, pack and pre-transpose the raw (torch-layout) parameter list."""
    (pw1, pb1, pw2, pb2, pw3, pb3, pw4, pb4,
     cw1, cb1, cw2, cb2, cw3, cb3, cw4, cb4,
     sw, sbias, bw, bbias,
     qw1, qb1, qw2, qb2, qw3, qb3, qw4, qb4) = params

    # PROC_OUT 64 -> 128 padding (zero rows/cols keep the math identical)
    pw4p, pb4p = _pad_cols(pw4, HID), _pad_cols(pb4, HID)
    qw1p = _pad_rows(qw1, HID)
    # PRED_OUT 10 -> 128 padding; pad bias = -1e9 so softmax ignores pad lanes
    qw4p = _pad_cols(qw4, HID)
    qb4p = _pad_cols(qb4, HID, fill=NEG_BIG)
    # fused scale|bias head, each half padded to 128 lanes
    sbw = jnp.concatenate([_pad_cols(sw, HID), _pad_cols(bw, HID)], axis=1)    # (128,256)
    sbb = jnp.concatenate([_pad_cols(sbias, HID), _pad_cols(bbias, HID)], axis=1)  # (1,256)
    # first process layer stays at K=784; only its transpose is lane-padded to 896
    pw1t = _pad_rows(pw1, IN_PAD).T                                            # (128,896)

    wstack = jnp.stack([
        pw2, pw3, pw4p, cw2, cw3, cw4, qw1p, qw2, qw3, qw4p,
        qw4p.T, qw3.T, qw2.T, qw1p.T, pw4p.T, pw3.T, pw2.T,
    ]).astype(mm_dtype)                                                        # (17,128,128)
    bstack = jnp.stack([
        pb1, pb2, pb3, pb4p, cw1, cb1, cb2, cb3, cb4, qb1, qb2, qb3, qb4p,
    ])                                                                         # (13,1,128) f32

    return (pw1.astype(mm_dtype), pw1t.astype(mm_dtype), sbw.astype(mm_dtype),
            sbb, wstack, bstack)


def _round_up(n, m):
    return -(-n // m) * m


# ----------------------------------------------------------------------------
# Wrapper
# ----------------------------------------------------------------------------
def classifier_forward(inputs, sigma, params, *, batch_tile=512,
                       matmul_dtype=jnp.bfloat16):
    """inputs: (B, 1, 28, 28) float32 NCHW;  sigma: (B,) or (B, 1) float32.

    Returns (score, logits) with score.shape == inputs.shape, logits (B, 10).
    matmul_dtype: operand dtype fed to the MXU (accumulation is always f32).
    """
    B = inputs.shape[0]
    x_flat = inputs.reshape(B, -1).astype(jnp.float32)        # (B, 784)
    sig2d = sigma.reshape(B, 1).astype(jnp.float32)           # (B, 1)

    # batch tiling: multiple of 8 sublanes; keep >=2 grid steps when the batch
    # allows it so the "parallel" axis shards across v7x's two TensorCores.
    B8 = _round_up(max(B, 8), 8)
    TB = _round_up(min(batch_tile, B8), 8)
    grid_b = pl.cdiv(B8, TB)
    if grid_b < 2 and B8 > 8:
        TB = _round_up(pl.cdiv(B8, 2), 8)
        grid_b = pl.cdiv(B8, TB)
    B_pad = grid_b * TB

    x_pad = jnp.pad(x_flat, ((0, B_pad - B), (0, 0)))          # (B_pad, 784), no lane pad
    sig_pad = jnp.pad(sig2d, ((0, B_pad - B), (0, 0)))

    pw1, pw1t, sbw, sbb, wstack, bstack = _prepare_kernel_params(params, matmul_dtype)

    def const_spec(a):
        zeros = (0,) * a.ndim
        return pl.BlockSpec(a.shape, lambda b: zeros)   # VMEM-resident, DMA'd once

    in_specs = [
        pl.BlockSpec((TB, IN_DIM), lambda b: (b, 0)),    # x
        pl.BlockSpec((TB, 1), lambda b: (b, 0)),         # sigma
        const_spec(pw1), const_spec(pw1t), const_spec(sbw), const_spec(sbb),
        const_spec(wstack), const_spec(bstack),
    ]
    out_specs = (
        pl.BlockSpec((TB, IN_PAD), lambda b: (b, 0)),    # score (lane-dense 896)
        pl.BlockSpec((TB, HID), lambda b: (b, 0)),       # logits (lane-dense 128)
    )

    score_pad, logits_pad = pl.pallas_call(
        _make_kernel(matmul_dtype),
        out_shape=(
            jax.ShapeDtypeStruct((B_pad, IN_PAD), jnp.float32),
            jax.ShapeDtypeStruct((B_pad, HID), jnp.float32),
        ),
        grid=(grid_b,),
        in_specs=in_specs,
        out_specs=out_specs,
        compiler_params=pltpu.CompilerParams(
            dimension_semantics=("parallel",),   # shard batch across TCs on v7x
            vmem_limit_bytes=48 << 20,           # safe on v7x's 64 MiB VMEM
        ),
    )(x_pad, sig_pad, pw1, pw1t, sbw, sbb, wstack, bstack)

    score = score_pad[:B, :IN_DIM].reshape(inputs.shape)
    logits = logits_pad[:B, :PRED_OUT]
    return score, logits


# ----------------------------------------------------------------------------
# Pure-JAX reference (uses jax.grad) to validate the in-kernel manual backward.
# matmul_dtype lets the reference apply the same MXU operand casts as the kernel.
# ----------------------------------------------------------------------------
def _reference(inputs, sigma, params, matmul_dtype=jnp.float32):
    B = inputs.shape[0]

    def dense(x, w, b):
        return jnp.dot(x.astype(matmul_dtype), w.astype(matmul_dtype),
                       preferred_element_type=jnp.float32) + b

    def mlp(x, layers):  # layers = [(w,b)] * 4, ReLU on first 3
        for w, b in layers[:-1]:
            x = jnp.maximum(dense(x, w, b), 0.0)
        w, b = layers[-1]
        return dense(x, w, b)

    p = [(params[2 * i], params[2 * i + 1]) for i in range(len(params) // 2)]
    proc_p, cond_p = p[0:4], p[4:8]
    scale_p, bias_p = p[8], p[9]
    pred_p = p[10:14]
    sig2d = sigma.reshape(B, -1).astype(jnp.float32)

    def forward(x_flat):
        processed = mlp(x_flat, proc_p)
        condition = mlp(sig2d, cond_p)
        scale = dense(condition, scale_p[0], scale_p[1])
        bias = dense(condition, bias_p[0], bias_p[1])
        return mlp(processed * scale + bias, pred_p)

    x_flat = inputs.reshape(B, -1).astype(jnp.float32)
    logits = forward(x_flat)
    energy_sum = lambda xf: jnp.sum(-jax.nn.logsumexp(forward(xf), axis=1))
    score = jax.grad(energy_sum)(x_flat).reshape(inputs.shape)
    return score, logits


if __name__ == "__main__":
    B = 2
    key = jax.random.PRNGKey(0)
    k_x, k_s, k_p = jax.random.split(key, 3)

    inputs = jax.random.normal(k_x, (B, 1, 28, 28), jnp.float32)
    sigma = jax.random.uniform(k_s, (B,), jnp.float32, minval=0.1, maxval=1.0)
    params = init_params(k_p)

    # f32 MXU path: validates the fused forward + analytic backward vs jax.grad.
    score32, logits32 = classifier_forward(inputs, sigma, params,
                                           matmul_dtype=jnp.float32)
    jax.block_until_ready((score32, logits32))
    assert score32.shape == inputs.shape
    assert logits32.shape == (B, PRED_OUT)
    ref_s32, ref_l32 = _reference(inputs, sigma, params, matmul_dtype=jnp.float32)
    assert jnp.allclose(logits32, ref_l32, rtol=1e-3, atol=1e-3)
    assert jnp.allclose(score32, ref_s32, rtol=1e-3, atol=1e-3)

    # default bf16-operand MXU path (f32 accumulation), checked against a
    # reference that applies the same operand casts.
    score, logits = classifier_forward(inputs, sigma, params)
    jax.block_until_ready((score, logits))
    assert score.shape == inputs.shape
    assert logits.shape == (B, PRED_OUT)
    ref_s, ref_l = _reference(inputs, sigma, params, matmul_dtype=jnp.bfloat16)
    assert jnp.allclose(logits, ref_l, rtol=5e-2, atol=5e-3)
    assert jnp.allclose(score, ref_s, rtol=5e-2, atol=5e-3)

    print("KERNEL_OK")
</pallas_src>

<mosaic_0001>
module attributes {stable_mosaic.version = 11 : i64} {
  func.func @kernel(%arg0: i32, %arg1: memref<8x784xf32, #tpu.memory_space<vmem>>, %arg2: memref<8x1xf32, #tpu.memory_space<vmem>>, %arg3: memref<784x128xf32, #tpu.memory_space<vmem>>, %arg4: memref<128x896xf32, #tpu.memory_space<vmem>>, %arg5: memref<128x256xf32, #tpu.memory_space<vmem>>, %arg6: memref<1x256xf32, #tpu.memory_space<vmem>>, %arg7: memref<17x128x128xf32, #tpu.memory_space<vmem>>, %arg8: memref<13x1x128xf32, #tpu.memory_space<vmem>>, %arg9: memref<8x896xf32, #tpu.memory_space<vmem>>, %arg10: memref<8x128xf32, #tpu.memory_space<vmem>>) attributes {dimension_semantics = [#tpu.dimension_semantics<parallel>], iteration_bounds = array<i64: 1>, scalar_prefetch = 0 : i64, scratch_operands = 0 : i64, tpu.core_type = #tpu.core_type<tc>, window_params = [{transform_indices = @transform_0, window_bounds = array<i64: 8, 784>}, {transform_indices = @transform_1, window_bounds = array<i64: 8, 1>}, {pipeline_mode = #tpu.pipeline_mode<synchronous>, transform_indices = @transform_2, window_bounds = array<i64: 784, 128>}, {pipeline_mode = #tpu.pipeline_mode<synchronous>, transform_indices = @transform_3, window_bounds = array<i64: 128, 896>}, {pipeline_mode = #tpu.pipeline_mode<synchronous>, transform_indices = @transform_4, window_bounds = array<i64: 128, 256>}, {pipeline_mode = #tpu.pipeline_mode<synchronous>, transform_indices = @transform_5, window_bounds = array<i64: 1, 256>}, {pipeline_mode = #tpu.pipeline_mode<synchronous>, transform_indices = @transform_6, window_bounds = array<i64: 17, 128, 128>}, {pipeline_mode = #tpu.pipeline_mode<synchronous>, transform_indices = @transform_7, window_bounds = array<i64: 13, 1, 128>}, {transform_indices = @transform_8, window_bounds = array<i64: 8, 896>}, {transform_indices = @transform_9, window_bounds = array<i64: 8, 128>}]} {
    %c0 = arith.constant 0 : index
    %c0_0 = arith.constant 0 : index
    %0 = vector.load %arg1[%c0, %c0_0] : memref<8x784xf32, #tpu.memory_space<vmem>>, vector<8x784xf32>
    %c0_1 = arith.constant 0 : index
    %c0_2 = arith.constant 0 : index
    %1 = vector.load %arg2[%c0_1, %c0_2] : memref<8x1xf32, #tpu.memory_space<vmem>>, vector<8x1xf32>
    %c0_3 = arith.constant 0 : index
    %c0_4 = arith.constant 0 : index
    %2 = vector.load %arg3[%c0_3, %c0_4] : memref<784x128xf32, #tpu.memory_space<vmem>>, vector<784x128xf32>
    %c0_5 = arith.constant 0 : index
    %c0_6 = arith.constant 0 : index
    %c0_7 = arith.constant 0 : index
    %3 = vector.load %arg8[%c0_5, %c0_6, %c0_7] : memref<13x1x128xf32, #tpu.memory_space<vmem>>, vector<1x1x128xf32>
    %4 = vector.shape_cast %3 : vector<1x1x128xf32> to vector<1x128xf32>
    %cst = arith.constant dense<0.000000e+00> : vector<8x128xf32>
    %5 = tpu.matmul %0, %2, %cst {dimension_numbers = #tpu.dot_dimension_numbers<[1], [0], [0], [1], [0, 0, 1, 1], [], []>} : vector<8x784xf32>, vector<784x128xf32>, vector<8x128xf32> -> vector<8x128xf32>
    %6 = vector.broadcast %4 : vector<1x128xf32> to vector<8x128xf32>
    %7 = arith.addf %5, %6 : vector<8x128xf32>
    %cst_8 = arith.constant 0.000000e+00 : f32
    %8 = vector.broadcast %cst_8 : f32 to vector<8x128xf32>
    %9 = arith.maximumf %7, %8 : vector<8x128xf32>
    %c0_9 = arith.constant 0 : index
    %c0_10 = arith.constant 0 : index
    %c0_11 = arith.constant 0 : index
    %10 = vector.load %arg7[%c0_9, %c0_10, %c0_11] : memref<17x128x128xf32, #tpu.memory_space<vmem>>, vector<1x128x128xf32>
    %11 = vector.shape_cast %10 : vector<1x128x128xf32> to vector<128x128xf32>
    %c1 = arith.constant 1 : index
    %c0_12 = arith.constant 0 : index
    %c0_13 = arith.constant 0 : index
    %12 = vector.load %arg8[%c1, %c0_12, %c0_13] : memref<13x1x128xf32, #tpu.memory_space<vmem>>, vector<1x1x128xf32>
    %13 = vector.shape_cast %12 : vector<1x1x128xf32> to vector<1x128xf32>
    %cst_14 = arith.constant dense<0.000000e+00> : vector<8x128xf32>
    %14 = tpu.matmul %9, %11, %cst_14 {dimension_numbers = #tpu.dot_dimension_numbers<[1], [0], [0], [1], [0, 0, 1, 1], [], []>} : vector<8x128xf32>, vector<128x128xf32>, vector<8x128xf32> -> vector<8x128xf32>
    %15 = vector.broadcast %13 : vector<1x128xf32> to vector<8x128xf32>
    %16 = arith.addf %14, %15 : vector<8x128xf32>
    %cst_15 = arith.constant 0.000000e+00 : f32
    %17 = vector.broadcast %cst_15 : f32 to vector<8x128xf32>
    %18 = arith.maximumf %16, %17 : vector<8x128xf32>
    %c1_16 = arith.constant 1 : index
    %c0_17 = arith.constant 0 : index
    %c0_18 = arith.constant 0 : index
    %19 = vector.load %arg7[%c1_16, %c0_17, %c0_18] : memref<17x128x128xf32, #tpu.memory_space<vmem>>, vector<1x128x128xf32>
    %20 = vector.shape_cast %19 : vector<1x128x128xf32> to vector<128x128xf32>
    %c2 = arith.constant 2 : index
    %c0_19 = arith.constant 0 : index
    %c0_20 = arith.constant 0 : index
    %21 = vector.load %arg8[%c2, %c0_19, %c0_20] : memref<13x1x128xf32, #tpu.memory_space<vmem>>, vector<1x1x128xf32>
    %22 = vector.shape_cast %21 : vector<1x1x128xf32> to vector<1x128xf32>
    %cst_21 = arith.constant dense<0.000000e+00> : vector<8x128xf32>
    %23 = tpu.matmul %18, %20, %cst_21 {dimension_numbers = #tpu.dot_dimension_numbers<[1], [0], [0], [1], [0, 0, 1, 1], [], []>} : vector<8x128xf32>, vector<128x128xf32>, vector<8x128xf32> -> vector<8x128xf32>
    %24 = vector.broadcast %22 : vector<1x128xf32> to vector<8x128xf32>
    %25 = arith.addf %23, %24 : vector<8x128xf32>
    %cst_22 = arith.constant 0.000000e+00 : f32
    %26 = vector.broadcast %cst_22 : f32 to vector<8x128xf32>
    %27 = arith.maximumf %25, %26 : vector<8x128xf32>
    %c2_23 = arith.constant 2 : index
    %c0_24 = arith.constant 0 : index
    %c0_25 = arith.constant 0 : index
    %28 = vector.load %arg7[%c2_23, %c0_24, %c0_25] : memref<17x128x128xf32, #tpu.memory_space<vmem>>, vector<1x128x128xf32>
    %29 = vector.shape_cast %28 : vector<1x128x128xf32> to vector<128x128xf32>
    %c3 = arith.constant 3 : index
    %c0_26 = arith.constant 0 : index
    %c0_27 = arith.constant 0 : index
    %30 = vector.load %arg8[%c3, %c0_26, %c0_27] : memref<13x1x128xf32, #tpu.memory_space<vmem>>, vector<1x1x128xf32>
    %31 = vector.shape_cast %30 : vector<1x1x128xf32> to vector<1x128xf32>
    %cst_28 = arith.constant dense<0.000000e+00> : vector<8x128xf32>
    %32 = tpu.matmul %27, %29, %cst_28 {dimension_numbers = #tpu.dot_dimension_numbers<[1], [0], [0], [1], [0, 0, 1, 1], [], []>} : vector<8x128xf32>, vector<128x128xf32>, vector<8x128xf32> -> vector<8x128xf32>
    %33 = vector.broadcast %31 : vector<1x128xf32> to vector<8x128xf32>
    %34 = arith.addf %32, %33 : vector<8x128xf32>
    %c4 = arith.constant 4 : index
    %c0_29 = arith.constant 0 : index
    %c0_30 = arith.constant 0 : index
    %35 = vector.load %arg8[%c4, %c0_29, %c0_30] : memref<13x1x128xf32, #tpu.memory_space<vmem>>, vector<1x1x128xf32>
    %36 = vector.shape_cast %35 : vector<1x1x128xf32> to vector<1x128xf32>
    %37 = vector.broadcast %1 : vector<8x1xf32> to vector<8x128xf32>
    %38 = vector.broadcast %36 : vector<1x128xf32> to vector<8x128xf32>
    %39 = arith.mulf %37, %38 : vector<8x128xf32>
    %c5 = arith.constant 5 : index
    %c0_31 = arith.constant 0 : index
    %c0_32 = arith.constant 0 : index
    %40 = vector.load %arg8[%c5, %c0_31, %c0_32] : memref<13x1x128xf32, #tpu.memory_space<vmem>>, vector<1x1x128xf32>
    %41 = vector.shape_cast %40 : vector<1x1x128xf32> to vector<1x128xf32>
    %42 = vector.broadcast %41 : vector<1x128xf32> to vector<8x128xf32>
    %43 = arith.addf %39, %42 : vector<8x128xf32>
    %cst_33 = arith.constant 0.000000e+00 : f32
    %44 = vector.broadcast %cst_33 : f32 to vector<8x128xf32>
    %45 = arith.maximumf %43, %44 : vector<8x128xf32>
    %c3_34 = arith.constant 3 : index
    %c0_35 = arith.constant 0 : index
    %c0_36 = arith.constant 0 : index
    %46 = vector.load %arg7[%c3_34, %c0_35, %c0_36] : memref<17x128x128xf32, #tpu.memory_space<vmem>>, vector<1x128x128xf32>
    %47 = vector.shape_cast %46 : vector<1x128x128xf32> to vector<128x128xf32>
    %c6 = arith.constant 6 : index
    %c0_37 = arith.constant 0 : index
    %c0_38 = arith.constant 0 : index
    %48 = vector.load %arg8[%c6, %c0_37, %c0_38] : memref<13x1x128xf32, #tpu.memory_space<vmem>>, vector<1x1x128xf32>
    %49 = vector.shape_cast %48 : vector<1x1x128xf32> to vector<1x128xf32>
    %cst_39 = arith.constant dense<0.000000e+00> : vector<8x128xf32>
    %50 = tpu.matmul %45, %47, %cst_39 {dimension_numbers = #tpu.dot_dimension_numbers<[1], [0], [0], [1], [0, 0, 1, 1], [], []>} : vector<8x128xf32>, vector<128x128xf32>, vector<8x128xf32> -> vector<8x128xf32>
    %51 = vector.broadcast %49 : vector<1x128xf32> to vector<8x128xf32>
    %52 = arith.addf %50, %51 : vector<8x128xf32>
    %cst_40 = arith.constant 0.000000e+00 : f32
    %53 = vector.broadcast %cst_40 : f32 to vector<8x128xf32>
    %54 = arith.maximumf %52, %53 : vector<8x128xf32>
    %c4_41 = arith.constant 4 : index
    %c0_42 = arith.constant 0 : index
    %c0_43 = arith.constant 0 : index
    %55 = vector.load %arg7[%c4_41, %c0_42, %c0_43] : memref<17x128x128xf32, #tpu.memory_space<vmem>>, vector<1x128x128xf32>
    %56 = vector.shape_cast %55 : vector<1x128x128xf32> to vector<128x128xf32>
    %c7 = arith.constant 7 : index
    %c0_44 = arith.constant 0 : index
    %c0_45 = arith.constant 0 : index
    %57 = vector.load %arg8[%c7, %c0_44, %c0_45] : memref<13x1x128xf32, #tpu.memory_space<vmem>>, vector<1x1x128xf32>
    %58 = vector.shape_cast %57 : vector<1x1x128xf32> to vector<1x128xf32>
    %cst_46 = arith.constant dense<0.000000e+00> : vector<8x128xf32>
    %59 = tpu.matmul %54, %56, %cst_46 {dimension_numbers = #tpu.dot_dimension_numbers<[1], [0], [0], [1], [0, 0, 1, 1], [], []>} : vector<8x128xf32>, vector<128x128xf32>, vector<8x128xf32> -> vector<8x128xf32>
    %60 = vector.broadcast %58 : vector<1x128xf32> to vector<8x128xf32>
    %61 = arith.addf %59, %60 : vector<8x128xf32>
    %cst_47 = arith.constant 0.000000e+00 : f32
    %62 = vector.broadcast %cst_47 : f32 to vector<8x128xf32>
    %63 = arith.maximumf %61, %62 : vector<8x128xf32>
    %c5_48 = arith.constant 5 : index
    %c0_49 = arith.constant 0 : index
    %c0_50 = arith.constant 0 : index
    %64 = vector.load %arg7[%c5_48, %c0_49, %c0_50] : memref<17x128x128xf32, #tpu.memory_space<vmem>>, vector<1x128x128xf32>
    %65 = vector.shape_cast %64 : vector<1x128x128xf32> to vector<128x128xf32>
    %c8 = arith.constant 8 : index
    %c0_51 = arith.constant 0 : index
    %c0_52 = arith.constant 0 : index
    %66 = vector.load %arg8[%c8, %c0_51, %c0_52] : memref<13x1x128xf32, #tpu.memory_space<vmem>>, vector<1x1x128xf32>
    %67 = vector.shape_cast %66 : vector<1x1x128xf32> to vector<1x128xf32>
    %cst_53 = arith.constant dense<0.000000e+00> : vector<8x128xf32>
    %68 = tpu.matmul %63, %65, %cst_53 {dimension_numbers = #tpu.dot_dimension_numbers<[1], [0], [0], [1], [0, 0, 1, 1], [], []>} : vector<8x128xf32>, vector<128x128xf32>, vector<8x128xf32> -> vector<8x128xf32>
    %69 = vector.broadcast %67 : vector<1x128xf32> to vector<8x128xf32>
    %70 = arith.addf %68, %69 : vector<8x128xf32>
    %c0_54 = arith.constant 0 : index
    %c0_55 = arith.constant 0 : index
    %71 = vector.load %arg5[%c0_54, %c0_55] : memref<128x256xf32, #tpu.memory_space<vmem>>, vector<128x256xf32>
    %c0_56 = arith.constant 0 : index
    %c0_57 = arith.constant 0 : index
    %72 = vector.load %arg6[%c0_56, %c0_57] : memref<1x256xf32, #tpu.memory_space<vmem>>, vector<1x256xf32>
    %cst_58 = arith.constant dense<0.000000e+00> : vector<8x256xf32>
    %73 = tpu.matmul %70, %71, %cst_58 {dimension_numbers = #tpu.dot_dimension_numbers<[1], [0], [0], [1], [0, 0, 1, 1], [], []>} : vector<8x128xf32>, vector<128x256xf32>, vector<8x256xf32> -> vector<8x256xf32>
    %74 = vector.broadcast %72 : vector<1x256xf32> to vector<8x256xf32>
    %75 = arith.addf %73, %74 : vector<8x256xf32>
    %76 = vector.extract_strided_slice %75 {offsets = [0, 0], sizes = [8, 128], strides = [1, 1]} : vector<8x256xf32> to vector<8x128xf32>
    %77 = vector.extract_strided_slice %75 {offsets = [0, 128], sizes = [8, 128], strides = [1, 1]} : vector<8x256xf32> to vector<8x128xf32>
    %78 = arith.mulf %34, %76 : vector<8x128xf32>
    %79 = arith.addf %78, %77 : vector<8x128xf32>
    %c6_59 = arith.constant 6 : index
    %c0_60 = arith.constant 0 : index
    %c0_61 = arith.constant 0 : index
    %80 = vector.load %arg7[%c6_59, %c0_60, %c0_61] : memref<17x128x128xf32, #tpu.memory_space<vmem>>, vector<1x128x128xf32>
    %81 = vector.shape_cast %80 : vector<1x128x128xf32> to vector<128x128xf32>
    %c9 = arith.constant 9 : index
    %c0_62 = arith.constant 0 : index
    %c0_63 = arith.constant 0 : index
    %82 = vector.load %arg8[%c9, %c0_62, %c0_63] : memref<13x1x128xf32, #tpu.memory_space<vmem>>, vector<1x1x128xf32>
    %83 = vector.shape_cast %82 : vector<1x1x128xf32> to vector<1x128xf32>
    %cst_64 = arith.constant dense<0.000000e+00> : vector<8x128xf32>
    %84 = tpu.matmul %79, %81, %cst_64 {dimension_numbers = #tpu.dot_dimension_numbers<[1], [0], [0], [1], [0, 0, 1, 1], [], []>} : vector<8x128xf32>, vector<128x128xf32>, vector<8x128xf32> -> vector<8x128xf32>
    %85 = vector.broadcast %83 : vector<1x128xf32> to vector<8x128xf32>
    %86 = arith.addf %84, %85 : vector<8x128xf32>
    %cst_65 = arith.constant 0.000000e+00 : f32
    %87 = vector.broadcast %cst_65 : f32 to vector<8x128xf32>
    %88 = arith.maximumf %86, %87 : vector<8x128xf32>
    %c7_66 = arith.constant 7 : index
    %c0_67 = arith.constant 0 : index
    %c0_68 = arith.constant 0 : index
    %89 = vector.load %arg7[%c7_66, %c0_67, %c0_68] : memref<17x128x128xf32, #tpu.memory_space<vmem>>, vector<1x128x128xf32>
    %90 = vector.shape_cast %89 : vector<1x128x128xf32> to vector<128x128xf32>
    %c10 = arith.constant 10 : index
    %c0_69 = arith.constant 0 : index
    %c0_70 = arith.constant 0 : index
    %91 = vector.load %arg8[%c10, %c0_69, %c0_70] : memref<13x1x128xf32, #tpu.memory_space<vmem>>, vector<1x1x128xf32>
    %92 = vector.shape_cast %91 : vector<1x1x128xf32> to vector<1x128xf32>
    %cst_71 = arith.constant dense<0.000000e+00> : vector<8x128xf32>
    %93 = tpu.matmul %88, %90, %cst_71 {dimension_numbers = #tpu.dot_dimension_numbers<[1], [0], [0], [1], [0, 0, 1, 1], [], []>} : vector<8x128xf32>, vector<128x128xf32>, vector<8x128xf32> -> vector<8x128xf32>
    %94 = vector.broadcast %92 : vector<1x128xf32> to vector<8x128xf32>
    %95 = arith.addf %93, %94 : vector<8x128xf32>
    %cst_72 = arith.constant 0.000000e+00 : f32
    %96 = vector.broadcast %cst_72 : f32 to vector<8x128xf32>
    %97 = arith.maximumf %95, %96 : vector<8x128xf32>
    %c8_73 = arith.constant 8 : index
    %c0_74 = arith.constant 0 : index
    %c0_75 = arith.constant 0 : index
    %98 = vector.load %arg7[%c8_73, %c0_74, %c0_75] : memref<17x128x128xf32, #tpu.memory_space<vmem>>, vector<1x128x128xf32>
    %99 = vector.shape_cast %98 : vector<1x128x128xf32> to vector<128x128xf32>
    %c11 = arith.constant 11 : index
    %c0_76 = arith.constant 0 : index
    %c0_77 = arith.constant 0 : index
    %100 = vector.load %arg8[%c11, %c0_76, %c0_77] : memref<13x1x128xf32, #tpu.memory_space<vmem>>, vector<1x1x128xf32>
    %101 = vector.shape_cast %100 : vector<1x1x128xf32> to vector<1x128xf32>
    %cst_78 = arith.constant dense<0.000000e+00> : vector<8x128xf32>
    %102 = tpu.matmul %97, %99, %cst_78 {dimension_numbers = #tpu.dot_dimension_numbers<[1], [0], [0], [1], [0, 0, 1, 1], [], []>} : vector<8x128xf32>, vector<128x128xf32>, vector<8x128xf32> -> vector<8x128xf32>
    %103 = vector.broadcast %101 : vector<1x128xf32> to vector<8x128xf32>
    %104 = arith.addf %102, %103 : vector<8x128xf32>
    %cst_79 = arith.constant 0.000000e+00 : f32
    %105 = vector.broadcast %cst_79 : f32 to vector<8x128xf32>
    %106 = arith.maximumf %104, %105 : vector<8x128xf32>
    %c9_80 = arith.constant 9 : index
    %c0_81 = arith.constant 0 : index
    %c0_82 = arith.constant 0 : index
    %107 = vector.load %arg7[%c9_80, %c0_81, %c0_82] : memref<17x128x128xf32, #tpu.memory_space<vmem>>, vector<1x128x128xf32>
    %108 = vector.shape_cast %107 : vector<1x128x128xf32> to vector<128x128xf32>
    %c12 = arith.constant 12 : index
    %c0_83 = arith.constant 0 : index
    %c0_84 = arith.constant 0 : index
    %109 = vector.load %arg8[%c12, %c0_83, %c0_84] : memref<13x1x128xf32, #tpu.memory_space<vmem>>, vector<1x1x128xf32>
    %110 = vector.shape_cast %109 : vector<1x1x128xf32> to vector<1x128xf32>
    %cst_85 = arith.constant dense<0.000000e+00> : vector<8x128xf32>
    %111 = tpu.matmul %106, %108, %cst_85 {dimension_numbers = #tpu.dot_dimension_numbers<[1], [0], [0], [1], [0, 0, 1, 1], [], []>} : vector<8x128xf32>, vector<128x128xf32>, vector<8x128xf32> -> vector<8x128xf32>
    %112 = vector.broadcast %110 : vector<1x128xf32> to vector<8x128xf32>
    %113 = arith.addf %111, %112 : vector<8x128xf32>
    %c0_86 = arith.constant 0 : index
    %c0_87 = arith.constant 0 : index
    %114 = vector.load %arg10[%c0_86, %c0_87] : memref<8x128xf32, #tpu.memory_space<vmem>>, vector<8x128xf32>
    tpu.vector_store %arg10[%c0_86, %c0_87], %113 {strides = array<i32>} : memref<8x128xf32, #tpu.memory_space<vmem>>, vector<8x128xf32>,
    %cst_88 = arith.constant dense<0xFF800000> : vector<8xf32>
    %115 = vector.multi_reduction <maximumf>, %113, %cst_88 [1] : vector<8x128xf32> to vector<8xf32>
    %116 = vector.shape_cast %115 : vector<8xf32> to vector<8x1xf32>
    %117 = vector.broadcast %116 : vector<8x1xf32> to vector<8x128xf32>
    %118 = arith.subf %113, %117 : vector<8x128xf32>
    %119 = math.exp %118 : vector<8x128xf32>
    %cst_89 = arith.constant dense<0.000000e+00> : vector<8xf32>
    %120 = vector.multi_reduction <add>, %119, %cst_89 [1] : vector<8x128xf32> to vector<8xf32>
    %121 = vector.shape_cast %120 : vector<8xf32> to vector<8x1xf32>
    %122 = tpu.reciprocal %121 : vector<8x1xf32> -> vector<8x1xf32>
    %123 = vector.broadcast %122 : vector<8x1xf32> to vector<8x128xf32>
    %124 = arith.mulf %119, %123 : vector<8x128xf32>
    %cst_90 = arith.constant 0.000000e+00 : f32
    %125 = vector.broadcast %cst_90 : f32 to vector<8x128xf32>
    %126 = arith.subf %125, %124 : vector<8x128xf32>
    %c10_91 = arith.constant 10 : index
    %c0_92 = arith.constant 0 : index
    %c0_93 = arith.constant 0 : index
    %127 = vector.load %arg7[%c10_91, %c0_92, %c0_93] : memref<17x128x128xf32, #tpu.memory_space<vmem>>, vector<1x128x128xf32>
    %128 = vector.shape_cast %127 : vector<1x128x128xf32> to vector<128x128xf32>
    %cst_94 = arith.constant dense<0.000000e+00> : vector<8x128xf32>
    %129 = tpu.matmul %126, %128, %cst_94 {dimension_numbers = #tpu.dot_dimension_numbers<[1], [0], [0], [1], [0, 0, 1, 1], [], []>} : vector<8x128xf32>, vector<128x128xf32>, vector<8x128xf32> -> vector<8x128xf32>
    %cst_95 = arith.constant 0.000000e+00 : f32
    %130 = vector.broadcast %cst_95 : f32 to vector<8x128xf32>
    %131 = arith.cmpf ogt, %104, %130 : vector<8x128xf32>
    %cst_96 = arith.constant 0.000000e+00 : f32
    %132 = vector.broadcast %cst_96 : f32 to vector<8x128xf32>
    %133 = arith.select %131, %129, %132 : vector<8x128xi1>, vector<8x128xf32>
    %c11_97 = arith.constant 11 : index
    %c0_98 = arith.constant 0 : index
    %c0_99 = arith.constant 0 : index
    %134 = vector.load %arg7[%c11_97, %c0_98, %c0_99] : memref<17x128x128xf32, #tpu.memory_space<vmem>>, vector<1x128x128xf32>
    %135 = vector.shape_cast %134 : vector<1x128x128xf32> to vector<128x128xf32>
    %cst_100 = arith.constant dense<0.000000e+00> : vector<8x128xf32>
    %136 = tpu.matmul %133, %135, %cst_100 {dimension_numbers = #tpu.dot_dimension_numbers<[1], [0], [0], [1], [0, 0, 1, 1], [], []>} : vector<8x128xf32>, vector<128x128xf32>, vector<8x128xf32> -> vector<8x128xf32>
    %cst_101 = arith.constant 0.000000e+00 : f32
    %137 = vector.broadcast %cst_101 : f32 to vector<8x128xf32>
    %138 = arith.cmpf ogt, %95, %137 : vector<8x128xf32>
    %cst_102 = arith.constant 0.000000e+00 : f32
    %139 = vector.broadcast %cst_102 : f32 to vector<8x128xf32>
    %140 = arith.select %138, %136, %139 : vector<8x128xi1>, vector<8x128xf32>
    %c12_103 = arith.constant 12 : index
    %c0_104 = arith.constant 0 : index
    %c0_105 = arith.constant 0 : index
    %141 = vector.load %arg7[%c12_103, %c0_104, %c0_105] : memref<17x128x128xf32, #tpu.memory_space<vmem>>, vector<1x128x128xf32>
    %142 = vector.shape_cast %141 : vector<1x128x128xf32> to vector<128x128xf32>
    %cst_106 = arith.constant dense<0.000000e+00> : vector<8x128xf32>
    %143 = tpu.matmul %140, %142, %cst_106 {dimension_numbers = #tpu.dot_dimension_numbers<[1], [0], [0], [1], [0, 0, 1, 1], [], []>} : vector<8x128xf32>, vector<128x128xf32>, vector<8x128xf32> -> vector<8x128xf32>
    %cst_107 = arith.constant 0.000000e+00 : f32
    %144 = vector.broadcast %cst_107 : f32 to vector<8x128xf32>
    %145 = arith.cmpf ogt, %86, %144 : vector<8x128xf32>
    %cst_108 = arith.constant 0.000000e+00 : f32
    %146 = vector.broadcast %cst_108 : f32 to vector<8x128xf32>
    %147 = arith.select %145, %143, %146 : vector<8x128xi1>, vector<8x128xf32>
    %c13 = arith.constant 13 : index
    %c0_109 = arith.constant 0 : index
    %c0_110 = arith.constant 0 : index
    %148 = vector.load %arg7[%c13, %c0_109, %c0_110] : memref<17x128x128xf32, #tpu.memory_space<vmem>>, vector<1x128x128xf32>
    %149 = vector.shape_cast %148 : vector<1x128x128xf32> to vector<128x128xf32>
    %cst_111 = arith.constant dense<0.000000e+00> : vector<8x128xf32>
    %150 = tpu.matmul %147, %149, %cst_111 {dimension_numbers = #tpu.dot_dimension_numbers<[1], [0], [0], [1], [0, 0, 1, 1], [], []>} : vector<8x128xf32>, vector<128x128xf32>, vector<8x128xf32> -> vector<8x128xf32>
    %151 = arith.mulf %150, %76 : vector<8x128xf32>
    %c14 = arith.constant 14 : index
    %c0_112 = arith.constant 0 : index
    %c0_113 = arith.constant 0 : index
    %152 = vector.load %arg7[%c14, %c0_112, %c0_113] : memref<17x128x128xf32, #tpu.memory_space<vmem>>, vector<1x128x128xf32>
    %153 = vector.shape_cast %152 : vector<1x128x128xf32> to vector<128x128xf32>
    %cst_114 = arith.constant dense<0.000000e+00> : vector<8x128xf32>
    %154 = tpu.matmul %151, %153, %cst_114 {dimension_numbers = #tpu.dot_dimension_numbers<[1], [0], [0], [1], [0, 0, 1, 1], [], []>} : vector<8x128xf32>, vector<128x128xf32>, vector<8x128xf32> -> vector<8x128xf32>
    %cst_115 = arith.constant 0.000000e+00 : f32
    %155 = vector.broadcast %cst_115 : f32 to vector<8x128xf32>
    %156 = arith.cmpf ogt, %25, %155 : vector<8x128xf32>
    %cst_116 = arith.constant 0.000000e+00 : f32
    %157 = vector.broadcast %cst_116 : f32 to vector<8x128xf32>
    %158 = arith.select %156, %154, %157 : vector<8x128xi1>, vector<8x128xf32>
    %c15 = arith.constant 15 : index
    %c0_117 = arith.constant 0 : index
    %c0_118 = arith.constant 0 : index
    %159 = vector.load %arg7[%c15, %c0_117, %c0_118] : memref<17x128x128xf32, #tpu.memory_space<vmem>>, vector<1x128x128xf32>
    %160 = vector.shape_cast %159 : vector<1x128x128xf32> to vector<128x128xf32>
    %cst_119 = arith.constant dense<0.000000e+00> : vector<8x128xf32>
    %161 = tpu.matmul %158, %160, %cst_119 {dimension_numbers = #tpu.dot_dimension_numbers<[1], [0], [0], [1], [0, 0, 1, 1], [], []>} : vector<8x128xf32>, vector<128x128xf32>, vector<8x128xf32> -> vector<8x128xf32>
    %cst_120 = arith.constant 0.000000e+00 : f32
    %162 = vector.broadcast %cst_120 : f32 to vector<8x128xf32>
    %163 = arith.cmpf ogt, %16, %162 : vector<8x128xf32>
    %cst_121 = arith.constant 0.000000e+00 : f32
    %164 = vector.broadcast %cst_121 : f32 to vector<8x128xf32>
    %165 = arith.select %163, %161, %164 : vector<8x128xi1>, vector<8x128xf32>
    %c16 = arith.constant 16 : index
    %c0_122 = arith.constant 0 : index
    %c0_123 = arith.constant 0 : index
    %166 = vector.load %arg7[%c16, %c0_122, %c0_123] : memref<17x128x128xf32, #tpu.memory_space<vmem>>, vector<1x128x128xf32>
    %167 = vector.shape_cast %166 : vector<1x128x128xf32> to vector<128x128xf32>
    %cst_124 = arith.constant dense<0.000000e+00> : vector<8x128xf32>
    %168 = tpu.matmul %165, %167, %cst_124 {dimension_numbers = #tpu.dot_dimension_numbers<[1], [0], [0], [1], [0, 0, 1, 1], [], []>} : vector<8x128xf32>, vector<128x128xf32>, vector<8x128xf32> -> vector<8x128xf32>
    %cst_125 = arith.constant 0.000000e+00 : f32
    %169 = vector.broadcast %cst_125 : f32 to vector<8x128xf32>
    %170 = arith.cmpf ogt, %7, %169 : vector<8x128xf32>
    %cst_126 = arith.constant 0.000000e+00 : f32
    %171 = vector.broadcast %cst_126 : f32 to vector<8x128xf32>
    %172 = arith.select %170, %168, %171 : vector<8x128xi1>, vector<8x128xf32>
    %c0_127 = arith.constant 0 : index
    %c0_128 = arith.constant 0 : index
    %173 = vector.load %arg4[%c0_127, %c0_128] : memref<128x896xf32, #tpu.memory_space<vmem>>, vector<128x896xf32>
    %cst_129 = arith.constant dense<0.000000e+00> : vector<8x896xf32>
    %174 = tpu.matmul %172, %173, %cst_129 {dimension_numbers = #tpu.dot_dimension_numbers<[1], [0], [0], [1], [0, 0, 1, 1], [], []>} : vector<8x128xf32>, vector<128x896xf32>, vector<8x896xf32> -> vector<8x896xf32>
    %c0_130 = arith.constant 0 : index
    %c0_131 = arith.constant 0 : index
    %175 = vector.load %arg9[%c0_130, %c0_131] : memref<8x896xf32, #tpu.memory_space<vmem>>, vector<8x896xf32>
    tpu.vector_store %arg9[%c0_130, %c0_131], %174 {strides = array<i32>} : memref<8x896xf32, #tpu.memory_space<vmem>>, vector<8x896xf32>,
    return
  }
  func.func @transform_0(%arg0: i32) -> (i32, i32) {
    %c0_i32 = arith.constant 0 : i32
    %c0_i32_0 = arith.constant 0 : i32
    return %arg0, %c0_i32 : i32, i32
  }
  func.func @transform_1(%arg0: i32) -> (i32, i32) {
    %c0_i32 = arith.constant 0 : i32
    %c0_i32_0 = arith.constant 0 : i32
    return %arg0, %c0_i32 : i32, i32
  }
  func.func @transform_2(%arg0: i32) -> (i32, i32) {
    %c0_i32 = arith.constant 0 : i32
    %c0_i32_0 = arith.constant 0 : i32
    %c0_i32_1 = arith.constant 0 : i32
    return %c0_i32, %c0_i32_0 : i32, i32
  }
  func.func @transform_3(%arg0: i32) -> (i32, i32) {
    %c0_i32 = arith.constant 0 : i32
    %c0_i32_0 = arith.constant 0 : i32
    %c0_i32_1 = arith.constant 0 : i32
    return %c0_i32, %c0_i32_0 : i32, i32
  }
  func.func @transform_4(%arg0: i32) -> (i32, i32) {
    %c0_i32 = arith.constant 0 : i32
    %c0_i32_0 = arith.constant 0 : i32
    %c0_i32_1 = arith.constant 0 : i32
    return %c0_i32, %c0_i32_0 : i32, i32
  }
  func.func @transform_5(%arg0: i32) -> (i32, i32) {
    %c0_i32 = arith.constant 0 : i32
    %c0_i32_0 = arith.constant 0 : i32
    %c0_i32_1 = arith.constant 0 : i32
    return %c0_i32, %c0_i32_0 : i32, i32
  }
  func.func @transform_6(%arg0: i32) -> (i32, i32, i32) {
    %c0_i32 = arith.constant 0 : i32
    %c0_i32_0 = arith.constant 0 : i32
    %c0_i32_1 = arith.constant 0 : i32
    %c0_i32_2 = arith.constant 0 : i32
    return %c0_i32, %c0_i32_0, %c0_i32_1 : i32, i32, i32
  }
  func.func @transform_7(%arg0: i32) -> (i32, i32, i32) {
    %c0_i32 = arith.constant 0 : i32
    %c0_i32_0 = arith.constant 0 : i32
    %c0_i32_1 = arith.constant 0 : i32
    %c0_i32_2 = arith.constant 0 : i32
    return %c0_i32, %c0_i32_0, %c0_i32_1 : i32, i32, i32
  }
  func.func @transform_8(%arg0: i32) -> (i32, i32) {
    %c0_i32 = arith.constant 0 : i32
    %c0_i32_0 = arith.constant 0 : i32
    return %arg0, %c0_i32 : i32, i32
  }
  func.func @transform_9(%arg0: i32) -> (i32, i32) {
    %c0_i32 = arith.constant 0 : i32
    %c0_i32_0 = arith.constant 0 : i32
    return %arg0, %c0_i32 : i32, i32
  }
}

</mosaic_0001>

<llo_original>
// kernel: tpu_custom_call.1
$region0: #{tpu_custom_call.1}
  #allocation0 [shape = 'u32[]', space=smem, size = 0x4, offset = 0x4, fixed_abs, tag = 'smem constant byte address 0x4 - core index']
  #allocation1 [shape = 'u32[72,128]{1,0:T(1,128)}', space=vmem, size = 0x9000, scoped, tag = 'internal scratch']
  %s0 = inlined_call_operand.hbm [shape: f32[8,784], index: 0, kind: input, shape index: {}]
  %s1 = inlined_call_operand.vmem [shape: f32[8,1], index: 1, kind: input, shape index: {}]
  %s2 = inlined_call_operand.hbm [shape: f32[784,128], index: 2, kind: input, shape index: {}]
  %s3 = inlined_call_operand.hbm [shape: f32[128,896], index: 3, kind: input, shape index: {}]
  %s4 = inlined_call_operand.hbm [shape: f32[128,256], index: 4, kind: input, shape index: {}]
  %s5 = inlined_call_operand.hbm [shape: f32[1,256], index: 5, kind: input, shape index: {}]
  %s6 = inlined_call_operand.hbm [shape: f32[17,128,128], index: 6, kind: input, shape index: {}]
  %s7 = inlined_call_operand.hbm [shape: f32[13,1,128], index: 7, kind: input, shape index: {}]
  %s8 = inlined_call_operand.hbm [shape: f32[8,896], index: 8, kind: output, shape index: {0}]
  %s9 = inlined_call_operand.hbm [shape: f32[8,128], index: 9, kind: output, shape index: {1}]
  %10 = xla_tuple %s8, %s9
  %s11 = sld [smem:[#allocation0]]
  $region78: #{tpu_custom_call.1} parent=0
    _
  %s13 = ssub.s32 1, %s11
  %s14 = scalar_select 0, %s13, %s11
  $region1: #{tpu_custom_call.1} parent=0
    #allocation2 [shape = 'u8[28672]{0}', space=vmem, size = 0x7000, scoped, tag = 'input window, operand 0, single buffered']
    #allocation3 [shape = 's32[1]{0}', space=sflag, size = 0x4, scoped, tag = 'scoped memory for tpu_custom_call.1']
    #allocation4 [shape = 's32[1]{0}', space=sflag, size = 0x4, scoped, tag = 'scoped memory for tpu_custom_call.1']
    #allocation5 [shape = 'u8[401408]{0}', space=vmem, size = 0x62000, scoped, tag = 'input window, operand 2, single buffered']
    #allocation6 [shape = 's32[1]{0}', space=sflag, size = 0x4, scoped, tag = 'scoped memory for tpu_custom_call.1']
    #allocation7 [shape = 'u8[458752]{0}', space=vmem, size = 0x70000, scoped, tag = 'input window, operand 3, single buffered']
    #allocation8 [shape = 'u8[131072]{0}', space=vmem, size = 0x20000, scoped, tag = 'input window, operand 4, single buffered']
    #allocation9 [shape = 's32[1]{0}', space=sflag, size = 0x4, scoped, tag = 'scoped memory for tpu_custom_call.1']
    #allocation10 [shape = 'u8[1024]{0}', space=vmem, size = 0x400, scoped, tag = 'input window, operand 5, single buffered']
    #allocation11 [shape = 'u8[1114112]{0}', space=vmem, size = 0x110000, scoped, tag = 'input window, operand 6, single buffered']
    #allocation12 [shape = 's32[1]{0}', space=sflag, size = 0x4, scoped, tag = 'scoped memory for tpu_custom_call.1']
    #allocation13 [shape = 'u8[6656]{0}', space=vmem, size = 0x1c00, scoped, tag = 'input window, operand 7, single buffered']
    #allocation14 [shape = 'u8[28672]{0}', space=vmem, size = 0x7000, scoped, tag = 'output window, operand 0, single buffered']
    #allocation15 [shape = 'u8[4096]{0}', space=vmem, size = 0x1000, scoped, tag = 'output window, operand 1, single buffered']
    #allocation16 [shape = 's32[1]{0}', space=sflag, size = 0x4, scoped, tag = 'scoped memory for tpu_custom_call.1']
    %15 = vsyncpa [#allocation3], 0
    %16 = vsyncpa [#allocation6], 0
    %17 = vsyncpa [#allocation9], 0
    %18 = vsyncpa [#allocation12], 0
    %19 = vsyncpa [#allocation4], 0
    %20 = vsyncpa [#allocation16], 0
    // Predicated region
    $region2: #{tpu_custom_call.1} parent=1 // pred_check
      _
    $region3: #{tpu_custom_call.1} parent=1 // pred_check_branch
      %22 = sbr.rel (0) target = $region5
    $region4: #{tpu_custom_call.1} parent=1 // pred_region
      %24 = vsyncadd [#allocation3], 0
      %s26 = sshll.u32 %s0, 4
      %s27 = int_to_ptr.hbm [resolvable:$true] %s26
      %s28 = sshll.u32 [#allocation2], 4
      %s29 = int_to_ptr.vmem [resolvable:$true] %s28
      %31 = dma.hbm_to_vmem [thread:$0]  %s27, 896, %s29, [#allocation3]
    $region5: #{tpu_custom_call.1} parent=1 // pred_fallthru
      _
    // Predicated region
    $region6: #{tpu_custom_call.1} parent=1 // pred_check
      _
    $region7: #{tpu_custom_call.1} parent=1 // pred_check_branch
      %33 = sbr.rel (0) target = $region9
    $region8: #{tpu_custom_call.1} parent=1 // pred_region
      _
    $region9: #{tpu_custom_call.1} parent=1 // pred_fallthru
      _
    // Predicated region
    $region10: #{tpu_custom_call.1} parent=1 // pred_check
      _
    $region11: #{tpu_custom_call.1} parent=1 // pred_check_branch
      %35 = sbr.rel (0) target = $region13
    $region12: #{tpu_custom_call.1} parent=1 // pred_region
      %37 = vsyncadd [#allocation6], 0
      %s38 = sshll.u32 %s2, 4
      %s39 = int_to_ptr.hbm [resolvable:$true] %s38
      %s40 = sshll.u32 [#allocation5], 4
      %s41 = int_to_ptr.vmem [resolvable:$true] %s40
      %46 = dma.hbm_to_vmem [thread:$0]  %s39, 12544, %s41, [#allocation6], 128, 128, 8
    $region13: #{tpu_custom_call.1} parent=1 // pred_fallthru
      _
    // Predicated region
    $region14: #{tpu_custom_call.1} parent=1 // pred_check
      _
    $region15: #{tpu_custom_call.1} parent=1 // pred_check_branch
      %48 = sbr.rel (0) target = $region17
    $region16: #{tpu_custom_call.1} parent=1 // pred_region
      %50 = vsyncadd [#allocation6], 0
      %s51 = sshll.u32 %s3, 4
      %s52 = int_to_ptr.hbm [resolvable:$true] %s51
      %s53 = sshll.u32 [#allocation7], 4
      %s54 = int_to_ptr.vmem [resolvable:$true] %s53
      %59 = dma.hbm_to_vmem [thread:$0]  %s52, 14336, %s54, [#allocation6], 896, 896, 56
    $region17: #{tpu_custom_call.1} parent=1 // pred_fallthru
      _
    // Predicated region
    $region18: #{tpu_custom_call.1} parent=1 // pred_check
      _
    $region19: #{tpu_custom_call.1} parent=1 // pred_check_branch
      %61 = sbr.rel (0) target = $region21
    $region20: #{tpu_custom_call.1} parent=1 // pred_region
      %63 = vsyncadd [#allocation9], 0
      %s64 = sshll.u32 %s4, 4
      %s65 = int_to_ptr.hbm [resolvable:$true] %s64
      %s66 = sshll.u32 [#allocation8], 4
      %s67 = int_to_ptr.vmem [resolvable:$true] %s66
      %72 = dma.hbm_to_vmem [thread:$0]  %s65, 4096, %s67, [#allocation9], 256, 256, 16
    $region21: #{tpu_custom_call.1} parent=1 // pred_fallthru
      _
    // Predicated region
    $region22: #{tpu_custom_call.1} parent=1 // pred_check
      _
    $region23: #{tpu_custom_call.1} parent=1 // pred_check_branch
      %74 = sbr.rel (0) target = $region25
    $region24: #{tpu_custom_call.1} parent=1 // pred_region
      %76 = vsyncadd [#allocation9], 0
      %s78 = sshll.u32 %s5, 4
      %s79 = int_to_ptr.hbm [resolvable:$true] %s78
      %s80 = sshll.u32 [#allocation10], 4
      %s81 = int_to_ptr.vmem [resolvable:$true] %s80
      %83 = dma.hbm_to_vmem [thread:$0]  %s79, 32, %s81, [#allocation9]
    $region25: #{tpu_custom_call.1} parent=1 // pred_fallthru
      _
    // Predicated region
    $region26: #{tpu_custom_call.1} parent=1 // pred_check
      _
    $region27: #{tpu_custom_call.1} parent=1 // pred_check_branch
      %85 = sbr.rel (0) target = $region29
    $region28: #{tpu_custom_call.1} parent=1 // pred_region
      %87 = vsyncadd [#allocation12], 0
      %s88 = sshll.u32 %s6, 4
      %s89 = int_to_ptr.hbm [resolvable:$true] %s88
      %s90 = sshll.u32 [#allocation11], 4
      %s91 = int_to_ptr.vmem [resolvable:$true] %s90
      %96 = dma.hbm_to_vmem [thread:$0]  %s89, 34816, %s91, [#allocation12], 128, 128, 8
    $region29: #{tpu_custom_call.1} parent=1 // pred_fallthru
      _
    // Predicated region
    $region30: #{tpu_custom_call.1} parent=1 // pred_check
      _
    $region31: #{tpu_custom_call.1} parent=1 // pred_check_branch
      %98 = sbr.rel (0) target = $region33
    $region32: #{tpu_custom_call.1} parent=1 // pred_region
      %100 = vsyncadd [#allocation12], 0
      %s101 = sshll.u32 %s7, 4
      %s102 = int_to_ptr.hbm [resolvable:$true] %s101
      %s103 = sshll.u32 [#allocation13], 4
      %s104 = int_to_ptr.vmem [resolvable:$true] %s103
      %109 = dma.hbm_to_vmem [thread:$0]  %s102, 208, %s104, [#allocation12], 16, 16, 1
    $region33: #{tpu_custom_call.1} parent=1 // pred_fallthru
      _
    // Predicated region
    $region34: #{tpu_custom_call.1} parent=1 // pred_check
      _
    $region35: #{tpu_custom_call.1} parent=1 // pred_check_branch
      %111 = sbr.rel (0) target = $region37
    $region36: #{tpu_custom_call.1} parent=1 // pred_region
      %113 = dma.done [#allocation3], 896
    $region37: #{tpu_custom_call.1} parent=1 // pred_fallthru
      _
    // Predicated region
    $region38: #{tpu_custom_call.1} parent=1 // pred_check
      _
    $region39: #{tpu_custom_call.1} parent=1 // pred_check_branch
      %115 = sbr.rel (0) target = $region41
    $region40: #{tpu_custom_call.1} parent=1 // pred_region
      %117 = dma.done [#allocation6], 12544
    $region41: #{tpu_custom_call.1} parent=1 // pred_fallthru
      _
    // Predicated region
    $region42: #{tpu_custom_call.1} parent=1 // pred_check
      _
    $region43: #{tpu_custom_call.1} parent=1 // pred_check_branch
      %119 = sbr.rel (0) target = $region45
    $region44: #{tpu_custom_call.1} parent=1 // pred_region
      %121 = dma.done [#allocation6], 14336
    $region45: #{tpu_custom_call.1} parent=1 // pred_fallthru
      _
    // Predicated region
    $region46: #{tpu_custom_call.1} parent=1 // pred_check
      _
    $region47: #{tpu_custom_call.1} parent=1 // pred_check_branch
      %123 = sbr.rel (0) target = $region49
    $region48: #{tpu_custom_call.1} parent=1 // pred_region
      %125 = dma.done [#allocation9], 4096
    $region49: #{tpu_custom_call.1} parent=1 // pred_fallthru
      _
    // Predicated region
    $region50: #{tpu_custom_call.1} parent=1 // pred_check
      _
    $region51: #{tpu_custom_call.1} parent=1 // pred_check_branch
      %127 = sbr.rel (0) target = $region53
    $region52: #{tpu_custom_call.1} parent=1 // pred_region
      %129 = dma.done [#allocation9], 32
    $region53: #{tpu_custom_call.1} parent=1 // pred_fallthru
      _
    // Predicated region
    $region54: #{tpu_custom_call.1} parent=1 // pred_check
      _
    $region55: #{tpu_custom_call.1} parent=1 // pred_check_branch
      %131 = sbr.rel (0) target = $region57
    $region56: #{tpu_custom_call.1} parent=1 // pred_region
      %133 = dma.done [#allocation12], 34816
    $region57: #{tpu_custom_call.1} parent=1 // pred_fallthru
      _
    // Predicated region
    $region58: #{tpu_custom_call.1} parent=1 // pred_check
      _
    $region59: #{tpu_custom_call.1} parent=1 // pred_check_branch
      %135 = sbr.rel (0) target = $region61
    $region60: #{tpu_custom_call.1} parent=1 // pred_region
      %137 = dma.done [#allocation12], 208
    $region61: #{tpu_custom_call.1} parent=1 // pred_fallthru
      _
    %v138 = vld [vmem:[#allocation2] sm:$0xff]
    %v139 = vld [vmem:[#allocation2 + $0x8] sm:$0xff]
    %v140 = vld [vmem:[#allocation2 + $0x10] sm:$0xff]
    %v141 = vld [vmem:[#allocation2 + $0x18] sm:$0xff]
    %v142 = vld [vmem:[#allocation2 + $0x20] sm:$0xff]
    %v143 = vld [vmem:[#allocation2 + $0x28] sm:$0xff]
    %v144 = vld [vmem:[#allocation2 + $0x30] sm:$0xff]
    %v145 = vld [vmem:[%s1] sm:$0xff]
    %v146 = vld [vmem:[#allocation5] sm:$0xff]
    %v147 = vld [vmem:[#allocation5 + $0x8] sm:$0xff]
    %v148 = vld [vmem:[#allocation5 + $0x10] sm:$0xff]
    %v149 = vld [vmem:[#allocation5 + $0x18] sm:$0xff]
    %v150 = vld [vmem:[#allocation5 + $0x20] sm:$0xff]
    %v151 = vld [vmem:[#allocation5 + $0x28] sm:$0xff]
    %v152 = vld [vmem:[#allocation5 + $0x30] sm:$0xff]
    %v153 = vld [vmem:[#allocation5 + $0x38] sm:$0xff]
    %v154 = vld [vmem:[#allocation5 + $0x40] sm:$0xff]
    %v155 = vld [vmem:[#allocation5 + $0x48] sm:$0xff]
    %v156 = vld [vmem:[#allocation5 + $0x50] sm:$0xff]
    %v157 = vld [vmem:[#allocation5 + $0x58] sm:$0xff]
    %v158 = vld [vmem:[#allocation5 + $0x60] sm:$0xff]
    %v159 = vld [vmem:[#allocation5 + $0x68] sm:$0xff]
    %v160 = vld [vmem:[#allocation5 + $0x70] sm:$0xff]
    %v161 = vld [vmem:[#allocation5 + $0x78] sm:$0xff]
    %v162 = vld [vmem:[#allocation5 + $0x80] sm:$0xff]
    %v163 = vld [vmem:[#allocation5 + $0x88] sm:$0xff]
    %v164 = vld [vmem:[#allocation5 + $0x90] sm:$0xff]
    %v165 = vld [vmem:[#allocation5 + $0x98] sm:$0xff]
    %v166 = vld [vmem:[#allocation5 + $0xa0] sm:$0xff]
    %v167 = vld [vmem:[#allocation5 + $0xa8] sm:$0xff]
    %v168 = vld [vmem:[#allocation5 + $0xb0] sm:$0xff]
    %v169 = vld [vmem:[#allocation5 + $0xb8] sm:$0xff]
    %v170 = vld [vmem:[#allocation5 + $0xc0] sm:$0xff]
    %v171 = vld [vmem:[#allocation5 + $0xc8] sm:$0xff]
    %v172 = vld [vmem:[#allocation5 + $0xd0] sm:$0xff]
    %v173 = vld [vmem:[#allocation5 + $0xd8] sm:$0xff]
    %v174 = vld [vmem:[#allocation5 + $0xe0] sm:$0xff]
    %v175 = vld [vmem:[#allocation5 + $0xe8] sm:$0xff]
    %v176 = vld [vmem:[#allocation5 + $0xf0] sm:$0xff]
    %v177 = vld [vmem:[#allocation5 + $0xf8] sm:$0xff]
    %v178 = vld [vmem:[#allocation5 + $0x100] sm:$0xff]
    %v179 = vld [vmem:[#allocation5 + $0x108] sm:$0xff]
    %v180 = vld [vmem:[#allocation5 + $0x110] sm:$0xff]
    %v181 = vld [vmem:[#allocation5 + $0x118] sm:$0xff]
    %v182 = vld [vmem:[#allocation5 + $0x120] sm:$0xff]
    %v183 = vld [vmem:[#allocation5 + $0x128] sm:$0xff]
    %v184 = vld [vmem:[#allocation5 + $0x130] sm:$0xff]
    %v185 = vld [vmem:[#allocation5 + $0x138] sm:$0xff]
    %v186 = vld [vmem:[#allocation5 + $0x140] sm:$0xff]
    %v187 = vld [vmem:[#allocation5 + $0x148] sm:$0xff]
    %v188 = vld [vmem:[#allocation5 + $0x150] sm:$0xff]
    %v189 = vld [vmem:[#allocation5 + $0x158] sm:$0xff]
    %v190 = vld [vmem:[#allocation5 + $0x160] sm:$0xff]
    %v191 = vld [vmem:[#allocation5 + $0x168] sm:$0xff]
    %v192 = vld [vmem:[#allocation5 + $0x170] sm:$0xff]
    %v193 = vld [vmem:[#allocation5 + $0x178] sm:$0xff]
    %v194 = vld [vmem:[#allocation5 + $0x180] sm:$0xff]
    %v195 = vld [vmem:[#allocation5 + $0x188] sm:$0xff]
    %v196 = vld [vmem:[#allocation5 + $0x190] sm:$0xff]
    %v197 = vld [vmem:[#allocation5 + $0x198] sm:$0xff]
    %v198 = vld [vmem:[#allocation5 + $0x1a0] sm:$0xff]
    %v199 = vld [vmem:[#allocation5 + $0x1a8] sm:$0xff]
    %v200 = vld [vmem:[#allocation5 + $0x1b0] sm:$0xff]
    %v201 = vld [vmem:[#allocation5 + $0x1b8] sm:$0xff]
    %v202 = vld [vmem:[#allocation5 + $0x1c0] sm:$0xff]
    %v203 = vld [vmem:[#allocation5 + $0x1c8] sm:$0xff]
    %v204 = vld [vmem:[#allocation5 + $0x1d0] sm:$0xff]
    %v205 = vld [vmem:[#allocation5 + $0x1d8] sm:$0xff]
    %v206 = vld [vmem:[#allocation5 + $0x1e0] sm:$0xff]
    %v207 = vld [vmem:[#allocation5 + $0x1e8] sm:$0xff]
    %v208 = vld [vmem:[#allocation5 + $0x1f0] sm:$0xff]
    %v209 = vld [vmem:[#allocation5 + $0x1f8] sm:$0xff]
    %v210 = vld [vmem:[#allocation5 + $0x200] sm:$0xff]
    %v211 = vld [vmem:[#allocation5 + $0x208] sm:$0xff]
    %v212 = vld [vmem:[#allocation5 + $0x210] sm:$0xff]
    %v213 = vld [vmem:[#allocation5 + $0x218] sm:$0xff]
    %v214 = vld [vmem:[#allocation5 + $0x220] sm:$0xff]
    %v215 = vld [vmem:[#allocation5 + $0x228] sm:$0xff]
    %v216 = vld [vmem:[#allocation5 + $0x230] sm:$0xff]
    %v217 = vld [vmem:[#allocation5 + $0x238] sm:$0xff]
    %v218 = vld [vmem:[#allocation5 + $0x240] sm:$0xff]
    %v219 = vld [vmem:[#allocation5 + $0x248] sm:$0xff]
    %v220 = vld [vmem:[#allocation5 + $0x250] sm:$0xff]
    %v221 = vld [vmem:[#allocation5 + $0x258] sm:$0xff]
    %v222 = vld [vmem:[#allocation5 + $0x260] sm:$0xff]
    %v223 = vld [vmem:[#allocation5 + $0x268] sm:$0xff]
    %v224 = vld [vmem:[#allocation5 + $0x270] sm:$0xff]
    %v225 = vld [vmem:[#allocation5 + $0x278] sm:$0xff]
    %v226 = vld [vmem:[#allocation5 + $0x280] sm:$0xff]
    %v227 = vld [vmem:[#allocation5 + $0x288] sm:$0xff]
    %v228 = vld [vmem:[#allocation5 + $0x290] sm:$0xff]
    %v229 = vld [vmem:[#allocation5 + $0x298] sm:$0xff]
    %v230 = vld [vmem:[#allocation5 + $0x2a0] sm:$0xff]
    %v231 = vld [vmem:[#allocation5 + $0x2a8] sm:$0xff]
    %v232 = vld [vmem:[#allocation5 + $0x2b0] sm:$0xff]
    %v233 = vld [vmem:[#allocation5 + $0x2b8] sm:$0xff]
    %v234 = vld [vmem:[#allocation5 + $0x2c0] sm:$0xff]
    %v235 = vld [vmem:[#allocation5 + $0x2c8] sm:$0xff]
    %v236 = vld [vmem:[#allocation5 + $0x2d0] sm:$0xff]
    %v237 = vld [vmem:[#allocation5 + $0x2d8] sm:$0xff]
    %v238 = vld [vmem:[#allocation5 + $0x2e0] sm:$0xff]
    %v239 = vld [vmem:[#allocation5 + $0x2e8] sm:$0xff]
    %v240 = vld [vmem:[#allocation5 + $0x2f0] sm:$0xff]
    %v241 = vld [vmem:[#allocation5 + $0x2f8] sm:$0xff]
    %v242 = vld [vmem:[#allocation5 + $0x300] sm:$0xff]
    %v243 = vld [vmem:[#allocation5 + $0x308] sm:$0xff]
    %v244 = vld [vmem:[#allocation13] sm:$0x1]
    %v246 = vperm.slane %v244, 0
    %vm248 = vcmask 130048
    %v250 = vsel %vm248, %v144, 0
    %252 = vmatpush.msra.mxu0 %v161
    %253 = vmatpush.msra.mxu0 %v160
    %254 = vmatpush.msra.mxu0 %v159
    %255 = vmatpush.msra.mxu0 %v158
    %256 = vmatpush.msra.mxu0 %v157
    %257 = vmatpush.msra.mxu0 %v156
    %258 = vmatpush.msra.mxu0 %v155
    %259 = vmatpush.msra.mxu0 %v154
    %260 = vmatpush.msra.mxu0 %v153
    %261 = vmatpush.msra.mxu0 %v152
    %262 = vmatpush.msra.mxu0 %v151
    %263 = vmatpush.msra.mxu0 %v150
    %264 = vmatpush.msra.mxu0 %v149
    %265 = vmatpush.msra.mxu0 %v148
    %266 = vmatpush.msra.mxu0 %v147
    %267 = vmatpush.msra.mxu0 %v146
    %268 = vmatmul.f32.gmra.mxu0 %v138
    %v269 = vpop.f32.mrf.mxu0
    %v270 = vadd.f32 %v246, %v269
    %271 = vdwg.mxu0
    %272 = vmatpush.msra.mxu0 %v177
    %273 = vmatpush.msra.mxu0 %v176
    %274 = vmatpush.msra.mxu0 %v175
    %275 = vmatpush.msra.mxu0 %v174
    %276 = vmatpush.msra.mxu0 %v173
    %277 = vmatpush.msra.mxu0 %v172
    %278 = vmatpush.msra.mxu0 %v171
    %279 = vmatpush.msra.mxu0 %v170
    %280 = vmatpush.msra.mxu0 %v169
    %281 = vmatpush.msra.mxu0 %v168
    %282 = vmatpush.msra.mxu0 %v167
    %283 = vmatpush.msra.mxu0 %v166
    %284 = vmatpush.msra.mxu0 %v165
    %285 = vmatpush.msra.mxu0 %v164
    %286 = vmatpush.msra.mxu0 %v163
    %287 = vmatpush.msra.mxu0 %v162
    %288 = vmatmul.f32.gmra.mxu0 %v139
    %v289 = vpop.f32.mrf.mxu0
    %v290 = vadd.f32 %v270, %v289
    %291 = vdwg.mxu0
    %292 = vmatpush.msra.mxu0 %v193
    %293 = vmatpush.msra.mxu0 %v192
    %294 = vmatpush.msra.mxu0 %v191
    %295 = vmatpush.msra.mxu0 %v190
    %296 = vmatpush.msra.mxu0 %v189
    %297 = vmatpush.msra.mxu0 %v188
    %298 = vmatpush.msra.mxu0 %v187
    %299 = vmatpush.msra.mxu0 %v186
    %300 = vmatpush.msra.mxu0 %v185
    %301 = vmatpush.msra.mxu0 %v184
    %302 = vmatpush.msra.mxu0 %v183
    %303 = vmatpush.msra.mxu0 %v182
    %304 = vmatpush.msra.mxu0 %v181
    %305 = vmatpush.msra.mxu0 %v180
    %306 = vmatpush.msra.mxu0 %v179
    %307 = vmatpush.msra.mxu0 %v178
    %308 = vmatmul.f32.gmra.mxu0 %v140
    %v309 = vpop.f32.mrf.mxu0
    %v310 = vadd.f32 %v290, %v309
    %311 = vdwg.mxu0
    %312 = vmatpush.msra.mxu0 %v209
    %313 = vmatpush.msra.mxu0 %v208
    %314 = vmatpush.msra.mxu0 %v207
    %315 = vmatpush.msra.mxu0 %v206
    %316 = vmatpush.msra.mxu0 %v205
    %317 = vmatpush.msra.mxu0 %v204
    %318 = vmatpush.msra.mxu0 %v203
    %319 = vmatpush.msra.mxu0 %v202
    %320 = vmatpush.msra.mxu0 %v201
    %321 = vmatpush.msra.mxu0 %v200
    %322 = vmatpush.msra.mxu0 %v199
    %323 = vmatpush.msra.mxu0 %v198
    %324 = vmatpush.msra.mxu0 %v197
    %325 = vmatpush.msra.mxu0 %v196
    %326 = vmatpush.msra.mxu0 %v195
    %327 = vmatpush.msra.mxu0 %v194
    %328 = vmatmul.f32.gmra.mxu0 %v141
    %v329 = vpop.f32.mrf.mxu0
    %v330 = vadd.f32 %v310, %v329
    %331 = vdwg.mxu0
    %332 = vmatpush.msra.mxu0 %v225
    %333 = vmatpush.msra.mxu0 %v224
    %334 = vmatpush.msra.mxu0 %v223
    %335 = vmatpush.msra.mxu0 %v222
    %336 = vmatpush.msra.mxu0 %v221
    %337 = vmatpush.msra.mxu0 %v220
    %338 = vmatpush.msra.mxu0 %v219
    %339 = vmatpush.msra.mxu0 %v218
    %340 = vmatpush.msra.mxu0 %v217
    %341 = vmatpush.msra.mxu0 %v216
    %342 = vmatpush.msra.mxu0 %v215
    %343 = vmatpush.msra.mxu0 %v214
    %344 = vmatpush.msra.mxu0 %v213
    %345 = vmatpush.msra.mxu0 %v212
    %346 = vmatpush.msra.mxu0 %v211
    %347 = vmatpush.msra.mxu0 %v210
    %348 = vmatmul.f32.gmra.mxu0 %v142
    %v349 = vpop.f32.mrf.mxu0
    %v350 = vadd.f32 %v330, %v349
    %351 = vdwg.mxu0
    %352 = vmatpush.msra.mxu0 %v241
    %353 = vmatpush.msra.mxu0 %v240
    %354 = vmatpush.msra.mxu0 %v239
    %355 = vmatpush.msra.mxu0 %v238
    %356 = vmatpush.msra.mxu0 %v237
    %357 = vmatpush.msra.mxu0 %v236
    %358 = vmatpush.msra.mxu0 %v235
    %359 = vmatpush.msra.mxu0 %v234
    %360 = vmatpush.msra.mxu0 %v233
    %361 = vmatpush.msra.mxu0 %v232
    %362 = vmatpush.msra.mxu0 %v231
    %363 = vmatpush.msra.mxu0 %v230
    %364 = vmatpush.msra.mxu0 %v229
    %365 = vmatpush.msra.mxu0 %v228
    %366 = vmatpush.msra.mxu0 %v227
    %367 = vmatpush.msra.mxu0 %v226
    %368 = vmatmul.f32.gmra.mxu0 %v143
    %v369 = vpop.f32.mrf.mxu0
    %v370 = vadd.f32 %v350, %v369
    %371 = vdwg.mxu0
    %372 = vmatpush.msra.mxu0 0.0
    %373 = vmatpush.msra.mxu0 0.0
    %374 = vmatpush.msra.mxu0 0.0
    %375 = vmatpush.msra.mxu0 0.0
    %376 = vmatpush.msra.mxu0 0.0
    %377 = vmatpush.msra.mxu0 0.0
    %378 = vmatpush.msra.mxu0 0.0
    %379 = vmatpush.msra.mxu0 0.0
    %380 = vmatpush.msra.mxu0 0.0
    %381 = vmatpush.msra.mxu0 0.0
    %382 = vmatpush.msra.mxu0 0.0
    %383 = vmatpush.msra.mxu0 0.0
    %384 = vmatpush.msra.mxu0 0.0
    %385 = vmatpush.msra.mxu0 0.0
    %386 = vmatpush.msra.mxu0 %v243
    %387 = vmatpush.msra.mxu0 %v242
    %388 = vmatmul.f32.gmra.mxu0 %v250
    %v389 = vpop.f32.mrf.mxu0
    %v390 = vadd.f32 %v370, %v389
    %391 = vdwg.mxu0
    %v392 = vmax.f32 %v390, 0.0
    %v393 = vld [vmem:[#allocation11] sm:$0xff]
    %v394 = vld [vmem:[#allocation11 + $0x8] sm:$0xff]
    %v395 = vld [vmem:[#allocation11 + $0x10] sm:$0xff]
    %v396 = vld [vmem:[#allocation11 + $0x18] sm:$0xff]
    %v397 = vld [vmem:[#allocation11 + $0x20] sm:$0xff]
    %v398 = vld [vmem:[#allocation11 + $0x28] sm:$0xff]
    %v399 = vld [vmem:[#allocation11 + $0x30] sm:$0xff]
    %v400 = vld [vmem:[#allocation11 + $0x38] sm:$0xff]
    %v401 = vld [vmem:[#allocation11 + $0x40] sm:$0xff]
    %v402 = vld [vmem:[#allocation11 + $0x48] sm:$0xff]
    %v403 = vld [vmem:[#allocation11 + $0x50] sm:$0xff]
    %v404 = vld [vmem:[#allocation11 + $0x58] sm:$0xff]
    %v405 = vld [vmem:[#allocation11 + $0x60] sm:$0xff]
    %v406 = vld [vmem:[#allocation11 + $0x68] sm:$0xff]
    %v407 = vld [vmem:[#allocation11 + $0x70] sm:$0xff]
    %v408 = vld [vmem:[#allocation11 + $0x78] sm:$0xff]
    %s409 = scalar_lea.vmem [#allocation13], 1
    %v410 = vld [vmem:[%s409] sm:$0x1]
    %v412 = vperm.slane %v410, 0
    %414 = vmatpush.msra.mxu0 %v408
    %415 = vmatpush.msra.mxu0 %v407
    %416 = vmatpush.msra.mxu0 %v406
    %417 = vmatpush.msra.mxu0 %v405
    %418 = vmatpush.msra.mxu0 %v404
    %419 = vmatpush.msra.mxu0 %v403
    %420 = vmatpush.msra.mxu0 %v402
    %421 = vmatpush.msra.mxu0 %v401
    %422 = vmatpush.msra.mxu0 %v400
    %423 = vmatpush.msra.mxu0 %v399
    %424 = vmatpush.msra.mxu0 %v398
    %425 = vmatpush.msra.mxu0 %v397
    %426 = vmatpush.msra.mxu0 %v396
    %427 = vmatpush.msra.mxu0 %v395
    %428 = vmatpush.msra.mxu0 %v394
    %429 = vmatpush.msra.mxu0 %v393
    %430 = vmatmul.f32.gmra.mxu0 %v392
    %v431 = vpop.f32.mrf.mxu0
    %v432 = vadd.f32 %v412, %v431
    %433 = vdwg.mxu0
    %v434 = vmax.f32 %v432, 0.0
    %s435 = scalar_lea.vmem [#allocation11], 128
    %v436 = vld [vmem:[%s435] sm:$0xff]
    %v437 = vld [vmem:[%s435 + $0x8] sm:$0xff]
    %v438 = vld [vmem:[%s435 + $0x10] sm:$0xff]
    %v439 = vld [vmem:[%s435 + $0x18] sm:$0xff]
    %v440 = vld [vmem:[%s435 + $0x20] sm:$0xff]
    %v441 = vld [vmem:[%s435 + $0x28] sm:$0xff]
    %v442 = vld [vmem:[%s435 + $0x30] sm:$0xff]
    %v443 = vld [vmem:[%s435 + $0x38] sm:$0xff]
    %v444 = vld [vmem:[%s435 + $0x40] sm:$0xff]
    %v445 = vld [vmem:[%s435 + $0x48] sm:$0xff]
    %v446 = vld [vmem:[%s435 + $0x50] sm:$0xff]
    %v447 = vld [vmem:[%s435 + $0x58] sm:$0xff]
    %v448 = vld [vmem:[%s435 + $0x60] sm:$0xff]
    %v449 = vld [vmem:[%s435 + $0x68] sm:$0xff]
    %v450 = vld [vmem:[%s435 + $0x70] sm:$0xff]
    %v451 = vld [vmem:[%s435 + $0x78] sm:$0xff]
    %s452 = scalar_lea.vmem [#allocation13], 2
    %v453 = vld [vmem:[%s452] sm:$0x1]
    %v455 = vperm.slane %v453, 0
    %457 = vmatpush.msra.mxu0 %v451
    %458 = vmatpush.msra.mxu0 %v450
    %459 = vmatpush.msra.mxu0 %v449
    %460 = vmatpush.msra.mxu0 %v448
    %461 = vmatpush.msra.mxu0 %v447
    %462 = vmatpush.msra.mxu0 %v446
    %463 = vmatpush.msra.mxu0 %v445
    %464 = vmatpush.msra.mxu0 %v444
    %465 = vmatpush.msra.mxu0 %v443
    %466 = vmatpush.msra.mxu0 %v442
    %467 = vmatpush.msra.mxu0 %v441
    %468 = vmatpush.msra.mxu0 %v440
    %469 = vmatpush.msra.mxu0 %v439
    %470 = vmatpush.msra.mxu0 %v438
    %471 = vmatpush.msra.mxu0 %v437
    %472 = vmatpush.msra.mxu0 %v436
    %473 = vmatmul.f32.gmra.mxu0 %v434
    %v474 = vpop.f32.mrf.mxu0
    %v475 = vadd.f32 %v455, %v474
    %476 = vdwg.mxu0
    %v477 = vmax.f32 %v475, 0.0
    %s478 = scalar_lea.vmem [#allocation11], 256
    %v479 = vld [vmem:[%s478] sm:$0xff]
    %v480 = vld [vmem:[%s478 + $0x8] sm:$0xff]
    %v481 = vld [vmem:[%s478 + $0x10] sm:$0xff]
    %v482 = vld [vmem:[%s478 + $0x18] sm:$0xff]
    %v483 = vld [vmem:[%s478 + $0x20] sm:$0xff]
    %v484 = vld [vmem:[%s478 + $0x28] sm:$0xff]
    %v485 = vld [vmem:[%s478 + $0x30] sm:$0xff]
    %v486 = vld [vmem:[%s478 + $0x38] sm:$0xff]
    %v487 = vld [vmem:[%s478 + $0x40] sm:$0xff]
    %v488 = vld [vmem:[%s478 + $0x48] sm:$0xff]
    %v489 = vld [vmem:[%s478 + $0x50] sm:$0xff]
    %v490 = vld [vmem:[%s478 + $0x58] sm:$0xff]
    %v491 = vld [vmem:[%s478 + $0x60] sm:$0xff]
    %v492 = vld [vmem:[%s478 + $0x68] sm:$0xff]
    %v493 = vld [vmem:[%s478 + $0x70] sm:$0xff]
    %v494 = vld [vmem:[%s478 + $0x78] sm:$0xff]
    %s495 = scalar_lea.vmem [#allocation13], 3
    %v496 = vld [vmem:[%s495] sm:$0x1]
    %v498 = vperm.slane %v496, 0
    %500 = vmatpush.msra.mxu0 %v494
    %501 = vmatpush.msra.mxu0 %v493
    %502 = vmatpush.msra.mxu0 %v492
    %503 = vmatpush.msra.mxu0 %v491
    %504 = vmatpush.msra.mxu0 %v490
    %505 = vmatpush.msra.mxu0 %v489
    %506 = vmatpush.msra.mxu0 %v488
    %507 = vmatpush.msra.mxu0 %v487
    %508 = vmatpush.msra.mxu0 %v486
    %509 = vmatpush.msra.mxu0 %v485
    %510 = vmatpush.msra.mxu0 %v484
    %511 = vmatpush.msra.mxu0 %v483
    %512 = vmatpush.msra.mxu0 %v482
    %513 = vmatpush.msra.mxu0 %v481
    %514 = vmatpush.msra.mxu0 %v480
    %515 = vmatpush.msra.mxu0 %v479
    %516 = vmatmul.f32.gmra.mxu0 %v477
    %v517 = vpop.f32.mrf.mxu0
    %v518 = vadd.f32 %v498, %v517
    %519 = vdwg.mxu0
    %s520 = scalar_lea.vmem [#allocation13], 4
    %v521 = vld [vmem:[%s520] sm:$0x1]
    %523 = vset.pattern.permute.xlu0 0
    %524 = vperm.xlu0 %523, %v145
    %v525 = vpop.permute.xlu0 %524
    %v528 = vperm.slane %v521, 0
    %v530 = vmul.f32 %v525, %v528
    %s531 = scalar_lea.vmem [#allocation13], 5
    %v532 = vld [vmem:[%s531] sm:$0x1]
    %v534 = vperm.slane %v532, 0
    %v536 = vadd.f32 %v530, %v534
    %v537 = vmax.f32 %v536, 0.0
    %s538 = scalar_lea.vmem [#allocation11], 384
    %v539 = vld [vmem:[%s538] sm:$0xff]
    %v540 = vld [vmem:[%s538 + $0x8] sm:$0xff]
    %v541 = vld [vmem:[%s538 + $0x10] sm:$0xff]
    %v542 = vld [vmem:[%s538 + $0x18] sm:$0xff]
    %v543 = vld [vmem:[%s538 + $0x20] sm:$0xff]
    %v544 = vld [vmem:[%s538 + $0x28] sm:$0xff]
    %v545 = vld [vmem:[%s538 + $0x30] sm:$0xff]
    %v546 = vld [vmem:[%s538 + $0x38] sm:$0xff]
    %v547 = vld [vmem:[%s538 + $0x40] sm:$0xff]
    %v548 = vld [vmem:[%s538 + $0x48] sm:$0xff]
    %v549 = vld [vmem:[%s538 + $0x50] sm:$0xff]
    %v550 = vld [vmem:[%s538 + $0x58] sm:$0xff]
    %v551 = vld [vmem:[%s538 + $0x60] sm:$0xff]
    %v552 = vld [vmem:[%s538 + $0x68] sm:$0xff]
    %v553 = vld [vmem:[%s538 + $0x70] sm:$0xff]
    %v554 = vld [vmem:[%s538 + $0x78] sm:$0xff]
    %s555 = scalar_lea.vmem [#allocation13], 6
    %v556 = vld [vmem:[%s555] sm:$0x1]
    %v558 = vperm.slane %v556, 0
    %560 = vmatpush.msra.mxu0 %v554
    %561 = vmatpush.msra.mxu0 %v553
    %562 = vmatpush.msra.mxu0 %v552
    %563 = vmatpush.msra.mxu0 %v551
    %564 = vmatpush.msra.mxu0 %v550
    %565 = vmatpush.msra.mxu0 %v549
    %566 = vmatpush.msra.mxu0 %v548
    %567 = vmatpush.msra.mxu0 %v547
    %568 = vmatpush.msra.mxu0 %v546
    %569 = vmatpush.msra.mxu0 %v545
    %570 = vmatpush.msra.mxu0 %v544
    %571 = vmatpush.msra.mxu0 %v543
    %572 = vmatpush.msra.mxu0 %v542
    %573 = vmatpush.msra.mxu0 %v541
    %574 = vmatpush.msra.mxu0 %v540
    %575 = vmatpush.msra.mxu0 %v539
    %576 = vmatmul.f32.gmra.mxu0 %v537
    %v577 = vpop.f32.mrf.mxu0
    %v578 = vadd.f32 %v558, %v577
    %579 = vdwg.mxu0
    %v580 = vmax.f32 %v578, 0.0
    %s581 = scalar_lea.vmem [#allocation11], 512
    %v582 = vld [vmem:[%s581] sm:$0xff]
    %v583 = vld [vmem:[%s581 + $0x8] sm:$0xff]
    %v584 = vld [vmem:[%s581 + $0x10] sm:$0xff]
    %v585 = vld [vmem:[%s581 + $0x18] sm:$0xff]
    %v586 = vld [vmem:[%s581 + $0x20] sm:$0xff]
    %v587 = vld [vmem:[%s581 + $0x28] sm:$0xff]
    %v588 = vld [vmem:[%s581 + $0x30] sm:$0xff]
    %v589 = vld [vmem:[%s581 + $0x38] sm:$0xff]
    %v590 = vld [vmem:[%s581 + $0x40] sm:$0xff]
    %v591 = vld [vmem:[%s581 + $0x48] sm:$0xff]
    %v592 = vld [vmem:[%s581 + $0x50] sm:$0xff]
    %v593 = vld [vmem:[%s581 + $0x58] sm:$0xff]
    %v594 = vld [vmem:[%s581 + $0x60] sm:$0xff]
    %v595 = vld [vmem:[%s581 + $0x68] sm:$0xff]
    %v596 = vld [vmem:[%s581 + $0x70] sm:$0xff]
    %v597 = vld [vmem:[%s581 + $0x78] sm:$0xff]
    %s598 = scalar_lea.vmem [#allocation13], 7
    %v599 = vld [vmem:[%s598] sm:$0x1]
    %v601 = vperm.slane %v599, 0
    %603 = vmatpush.msra.mxu0 %v597
    %604 = vmatpush.msra.mxu0 %v596
    %605 = vmatpush.msra.mxu0 %v595
    %606 = vmatpush.msra.mxu0 %v594
    %607 = vmatpush.msra.mxu0 %v593
    %608 = vmatpush.msra.mxu0 %v592
    %609 = vmatpush.msra.mxu0 %v591
    %610 = vmatpush.msra.mxu0 %v590
    %611 = vmatpush.msra.mxu0 %v589
    %612 = vmatpush.msra.mxu0 %v588
    %613 = vmatpush.msra.mxu0 %v587
    %614 = vmatpush.msra.mxu0 %v586
    %615 = vmatpush.msra.mxu0 %v585
    %616 = vmatpush.msra.mxu0 %v584
    %617 = vmatpush.msra.mxu0 %v583
    %618 = vmatpush.msra.mxu0 %v582
    %619 = vmatmul.f32.gmra.mxu0 %v580
    %v620 = vpop.f32.mrf.mxu0
    %v621 = vadd.f32 %v601, %v620
    %622 = vdwg.mxu0
    %v623 = vmax.f32 %v621, 0.0
    %s624 = scalar_lea.vmem [#allocation11], 640
    %v625 = vld [vmem:[%s624] sm:$0xff]
    %v626 = vld [vmem:[%s624 + $0x8] sm:$0xff]
    %v627 = vld [vmem:[%s624 + $0x10] sm:$0xff]
    %v628 = vld [vmem:[%s624 + $0x18] sm:$0xff]
    %v629 = vld [vmem:[%s624 + $0x20] sm:$0xff]
    %v630 = vld [vmem:[%s624 + $0x28] sm:$0xff]
    %v631 = vld [vmem:[%s624 + $0x30] sm:$0xff]
    %v632 = vld [vmem:[%s624 + $0x38] sm:$0xff]
    %v633 = vld [vmem:[%s624 + $0x40] sm:$0xff]
    %v634 = vld [vmem:[%s624 + $0x48] sm:$0xff]
    %v635 = vld [vmem:[%s624 + $0x50] sm:$0xff]
    %v636 = vld [vmem:[%s624 + $0x58] sm:$0xff]
    %v637 = vld [vmem:[%s624 + $0x60] sm:$0xff]
    %v638 = vld [vmem:[%s624 + $0x68] sm:$0xff]
    %v639 = vld [vmem:[%s624 + $0x70] sm:$0xff]
    %v640 = vld [vmem:[%s624 + $0x78] sm:$0xff]
    %s641 = scalar_lea.vmem [#allocation13], 8
    %v642 = vld [vmem:[%s641] sm:$0x1]
    %v644 = vperm.slane %v642, 0
    %646 = vmatpush.msra.mxu0 %v640
    %647 = vmatpush.msra.mxu0 %v639
    %648 = vmatpush.msra.mxu0 %v638
    %649 = vmatpush.msra.mxu0 %v637
    %650 = vmatpush.msra.mxu0 %v636
    %651 = vmatpush.msra.mxu0 %v635
    %652 = vmatpush.msra.mxu0 %v634
    %653 = vmatpush.msra.mxu0 %v633
    %654 = vmatpush.msra.mxu0 %v632
    %655 = vmatpush.msra.mxu0 %v631
    %656 = vmatpush.msra.mxu0 %v630
    %657 = vmatpush.msra.mxu0 %v629
    %658 = vmatpush.msra.mxu0 %v628
    %659 = vmatpush.msra.mxu0 %v627
    %660 = vmatpush.msra.mxu0 %v626
    %661 = vmatpush.msra.mxu0 %v625
    %662 = vmatmul.f32.gmra.mxu0 %v623
    %v663 = vpop.f32.mrf.mxu0
    %v664 = vadd.f32 %v644, %v663
    %665 = vdwg.mxu0
    %v666 = vld [vmem:[#allocation8] sm:$0xff]
    %v667 = vld [vmem:[#allocation8 + $0x8] sm:$0xff]
    %v668 = vld [vmem:[#allocation8 + $0x10] sm:$0xff]
    %v669 = vld [vmem:[#allocation8 + $0x18] sm:$0xff]
    %v670 = vld [vmem:[#allocation8 + $0x20] sm:$0xff]
    %v671 = vld [vmem:[#allocation8 + $0x28] sm:$0xff]
    %v672 = vld [vmem:[#allocation8 + $0x30] sm:$0xff]
    %v673 = vld [vmem:[#allocation8 + $0x38] sm:$0xff]
    %v674 = vld [vmem:[#allocation8 + $0x40] sm:$0xff]
    %v675 = vld [vmem:[#allocation8 + $0x48] sm:$0xff]
    %v676 = vld [vmem:[#allocation8 + $0x50] sm:$0xff]
    %v677 = vld [vmem:[#allocation8 + $0x58] sm:$0xff]
    %v678 = vld [vmem:[#allocation8 + $0x60] sm:$0xff]
    %v679 = vld [vmem:[#allocation8 + $0x68] sm:$0xff]
    %v680 = vld [vmem:[#allocation8 + $0x70] sm:$0xff]
    %v681 = vld [vmem:[#allocation8 + $0x78] sm:$0xff]
    %v682 = vld [vmem:[#allocation8 + $0x80] sm:$0xff]
    %v683 = vld [vmem:[#allocation8 + $0x88] sm:$0xff]
    %v684 = vld [vmem:[#allocation8 + $0x90] sm:$0xff]
    %v685 = vld [vmem:[#allocation8 + $0x98] sm:$0xff]
    %v686 = vld [vmem:[#allocation8 + $0xa0] sm:$0xff]
    %v687 = vld [vmem:[#allocation8 + $0xa8] sm:$0xff]
    %v688 = vld [vmem:[#allocation8 + $0xb0] sm:$0xff]
    %v689 = vld [vmem:[#allocation8 + $0xb8] sm:$0xff]
    %v690 = vld [vmem:[#allocation8 + $0xc0] sm:$0xff]
    %v691 = vld [vmem:[#allocation8 + $0xc8] sm:$0xff]
    %v692 = vld [vmem:[#allocation8 + $0xd0] sm:$0xff]
    %v693 = vld [vmem:[#allocation8 + $0xd8] sm:$0xff]
    %v694 = vld [vmem:[#allocation8 + $0xe0] sm:$0xff]
    %v695 = vld [vmem:[#allocation8 + $0xe8] sm:$0xff]
    %v696 = vld [vmem:[#allocation8 + $0xf0] sm:$0xff]
    %v697 = vld [vmem:[#allocation8 + $0xf8] sm:$0xff]
    %v698 = vld [vmem:[#allocation10] sm:$0x3]
    %v700 = vperm.slane %v698, 0
    %v701 = vperm.slane %v698, 1
    %704 = vmatpush.msra.mxu0 %v696
    %705 = vmatpush.msra.mxu0 %v694
    %706 = vmatpush.msra.mxu0 %v692
    %707 = vmatpush.msra.mxu0 %v690
    %708 = vmatpush.msra.mxu0 %v688
    %709 = vmatpush.msra.mxu0 %v686
    %710 = vmatpush.msra.mxu0 %v684
    %711 = vmatpush.msra.mxu0 %v682
    %712 = vmatpush.msra.mxu0 %v680
    %713 = vmatpush.msra.mxu0 %v678
    %714 = vmatpush.msra.mxu0 %v676
    %715 = vmatpush.msra.mxu0 %v674
    %716 = vmatpush.msra.mxu0 %v672
    %717 = vmatpush.msra.mxu0 %v670
    %718 = vmatpush.msra.mxu0 %v668
    %719 = vmatpush.msra.mxu0 %v666
    %720 = vmatmul.f32.gmra.mxu0 %v664
    %v721 = vpop.f32.mrf.mxu0
    %v722 = vadd.f32 %v700, %v721
    %723 = vdwg.mxu0
    %724 = vmatpush.msra.mxu0 %v697
    %725 = vmatpush.msra.mxu0 %v695
    %726 = vmatpush.msra.mxu0 %v693
    %727 = vmatpush.msra.mxu0 %v691
    %728 = vmatpush.msra.mxu0 %v689
    %729 = vmatpush.msra.mxu0 %v687
    %730 = vmatpush.msra.mxu0 %v685
    %731 = vmatpush.msra.mxu0 %v683
    %732 = vmatpush.msra.mxu0 %v681
    %733 = vmatpush.msra.mxu0 %v679
    %734 = vmatpush.msra.mxu0 %v677
    %735 = vmatpush.msra.mxu0 %v675
    %736 = vmatpush.msra.mxu0 %v673
    %737 = vmatpush.msra.mxu0 %v671
    %738 = vmatpush.msra.mxu0 %v669
    %739 = vmatpush.msra.mxu0 %v667
    %740 = vmatmul.f32.gmra.mxu0 %v664
    %v741 = vpop.f32.mrf.mxu0
    %v742 = vadd.f32 %v701, %v741
    %743 = vdwg.mxu0
    %v744 = vmul.f32 %v518, %v722
    %v745 = vadd.f32 %v744, %v742
    %s746 = scalar_lea.vmem [#allocation11], 768
    %v747 = vld [vmem:[%s746] sm:$0xff]
    %v748 = vld [vmem:[%s746 + $0x8] sm:$0xff]
    %v749 = vld [vmem:[%s746 + $0x10] sm:$0xff]
    %v750 = vld [vmem:[%s746 + $0x18] sm:$0xff]
    %v751 = vld [vmem:[%s746 + $0x20] sm:$0xff]
    %v752 = vld [vmem:[%s746 + $0x28] sm:$0xff]
    %v753 = vld [vmem:[%s746 + $0x30] sm:$0xff]
    %v754 = vld [vmem:[%s746 + $0x38] sm:$0xff]
    %v755 = vld [vmem:[%s746 + $0x40] sm:$0xff]
    %v756 = vld [vmem:[%s746 + $0x48] sm:$0xff]
    %v757 = vld [vmem:[%s746 + $0x50] sm:$0xff]
    %v758 = vld [vmem:[%s746 + $0x58] sm:$0xff]
    %v759 = vld [vmem:[%s746 + $0x60] sm:$0xff]
    %v760 = vld [vmem:[%s746 + $0x68] sm:$0xff]
    %v761 = vld [vmem:[%s746 + $0x70] sm:$0xff]
    %v762 = vld [vmem:[%s746 + $0x78] sm:$0xff]
    %s763 = scalar_lea.vmem [#allocation13], 9
    %v764 = vld [vmem:[%s763] sm:$0x1]
    %v766 = vperm.slane %v764, 0
    %768 = vmatpush.msra.mxu0 %v762
    %769 = vmatpush.msra.mxu0 %v761
    %770 = vmatpush.msra.mxu0 %v760
    %771 = vmatpush.msra.mxu0 %v759
    %772 = vmatpush.msra.mxu0 %v758
    %773 = vmatpush.msra.mxu0 %v757
    %774 = vmatpush.msra.mxu0 %v756
    %775 = vmatpush.msra.mxu0 %v755
    %776 = vmatpush.msra.mxu0 %v754
    %777 = vmatpush.msra.mxu0 %v753
    %778 = vmatpush.msra.mxu0 %v752
    %779 = vmatpush.msra.mxu0 %v751
    %780 = vmatpush.msra.mxu0 %v750
    %781 = vmatpush.msra.mxu0 %v749
    %782 = vmatpush.msra.mxu0 %v748
    %783 = vmatpush.msra.mxu0 %v747
    %784 = vmatmul.f32.gmra.mxu0 %v745
    %v785 = vpop.f32.mrf.mxu0
    %v786 = vadd.f32 %v766, %v785
    %787 = vdwg.mxu0
    %v788 = vmax.f32 %v786, 0.0
    %s789 = scalar_lea.vmem [#allocation11], 896
    %v790 = vld [vmem:[%s789] sm:$0xff]
    %v791 = vld [vmem:[%s789 + $0x8] sm:$0xff]
    %v792 = vld [vmem:[%s789 + $0x10] sm:$0xff]
    %v793 = vld [vmem:[%s789 + $0x18] sm:$0xff]
    %v794 = vld [vmem:[%s789 + $0x20] sm:$0xff]
    %v795 = vld [vmem:[%s789 + $0x28] sm:$0xff]
    %v796 = vld [vmem:[%s789 + $0x30] sm:$0xff]
    %v797 = vld [vmem:[%s789 + $0x38] sm:$0xff]
    %v798 = vld [vmem:[%s789 + $0x40] sm:$0xff]
    %v799 = vld [vmem:[%s789 + $0x48] sm:$0xff]
    %v800 = vld [vmem:[%s789 + $0x50] sm:$0xff]
    %v801 = vld [vmem:[%s789 + $0x58] sm:$0xff]
    %v802 = vld [vmem:[%s789 + $0x60] sm:$0xff]
    %v803 = vld [vmem:[%s789 + $0x68] sm:$0xff]
    %v804 = vld [vmem:[%s789 + $0x70] sm:$0xff]
    %v805 = vld [vmem:[%s789 + $0x78] sm:$0xff]
    %s806 = scalar_lea.vmem [#allocation13], 10
    %v807 = vld [vmem:[%s806] sm:$0x1]
    %v809 = vperm.slane %v807, 0
    %811 = vmatpush.msra.mxu0 %v805
    %812 = vmatpush.msra.mxu0 %v804
    %813 = vmatpush.msra.mxu0 %v803
    %814 = vmatpush.msra.mxu0 %v802
    %815 = vmatpush.msra.mxu0 %v801
    %816 = vmatpush.msra.mxu0 %v800
    %817 = vmatpush.msra.mxu0 %v799
    %818 = vmatpush.msra.mxu0 %v798
    %819 = vmatpush.msra.mxu0 %v797
    %820 = vmatpush.msra.mxu0 %v796
    %821 = vmatpush.msra.mxu0 %v795
    %822 = vmatpush.msra.mxu0 %v794
    %823 = vmatpush.msra.mxu0 %v793
    %824 = vmatpush.msra.mxu0 %v792
    %825 = vmatpush.msra.mxu0 %v791
    %826 = vmatpush.msra.mxu0 %v790
    %827 = vmatmul.f32.gmra.mxu0 %v788
    %v828 = vpop.f32.mrf.mxu0
    %v829 = vadd.f32 %v809, %v828
    %830 = vdwg.mxu0
    %v831 = vmax.f32 %v829, 0.0
    %s832 = scalar_lea.vmem [#allocation11], 1024
    %v833 = vld [vmem:[%s832] sm:$0xff]
    %v834 = vld [vmem:[%s832 + $0x8] sm:$0xff]
    %v835 = vld [vmem:[%s832 + $0x10] sm:$0xff]
    %v836 = vld [vmem:[%s832 + $0x18] sm:$0xff]
    %v837 = vld [vmem:[%s832 + $0x20] sm:$0xff]
    %v838 = vld [vmem:[%s832 + $0x28] sm:$0xff]
    %v839 = vld [vmem:[%s832 + $0x30] sm:$0xff]
    %v840 = vld [vmem:[%s832 + $0x38] sm:$0xff]
    %v841 = vld [vmem:[%s832 + $0x40] sm:$0xff]
    %v842 = vld [vmem:[%s832 + $0x48] sm:$0xff]
    %v843 = vld [vmem:[%s832 + $0x50] sm:$0xff]
    %v844 = vld [vmem:[%s832 + $0x58] sm:$0xff]
    %v845 = vld [vmem:[%s832 + $0x60] sm:$0xff]
    %v846 = vld [vmem:[%s832 + $0x68] sm:$0xff]
    %v847 = vld [vmem:[%s832 + $0x70] sm:$0xff]
    %v848 = vld [vmem:[%s832 + $0x78] sm:$0xff]
    %s849 = scalar_lea.vmem [#allocation13], 11
    %v850 = vld [vmem:[%s849] sm:$0x1]
    %v852 = vperm.slane %v850, 0
    %854 = vmatpush.msra.mxu0 %v848
    %855 = vmatpush.msra.mxu0 %v847
    %856 = vmatpush.msra.mxu0 %v846
    %857 = vmatpush.msra.mxu0 %v845
    %858 = vmatpush.msra.mxu0 %v844
    %859 = vmatpush.msra.mxu0 %v843
    %860 = vmatpush.msra.mxu0 %v842
    %861 = vmatpush.msra.mxu0 %v841
    %862 = vmatpush.msra.mxu0 %v840
    %863 = vmatpush.msra.mxu0 %v839
    %864 = vmatpush.msra.mxu0 %v838
    %865 = vmatpush.msra.mxu0 %v837
    %866 = vmatpush.msra.mxu0 %v836
    %867 = vmatpush.msra.mxu0 %v835
    %868 = vmatpush.msra.mxu0 %v834
    %869 = vmatpush.msra.mxu0 %v833
    %870 = vmatmul.f32.gmra.mxu0 %v831
    %v871 = vpop.f32.mrf.mxu0
    %v872 = vadd.f32 %v852, %v871
    %873 = vdwg.mxu0
    %v874 = vmax.f32 %v872, 0.0
    %s875 = scalar_lea.vmem [#allocation11], 1152
    %v876 = vld [vmem:[%s875] sm:$0xff]
    %v877 = vld [vmem:[%s875 + $0x8] sm:$0xff]
    %v878 = vld [vmem:[%s875 + $0x10] sm:$0xff]
    %v879 = vld [vmem:[%s875 + $0x18] sm:$0xff]
    %v880 = vld [vmem:[%s875 + $0x20] sm:$0xff]
    %v881 = vld [vmem:[%s875 + $0x28] sm:$0xff]
    %v882 = vld [vmem:[%s875 + $0x30] sm:$0xff]
    %v883 = vld [vmem:[%s875 + $0x38] sm:$0xff]
    %v884 = vld [vmem:[%s875 + $0x40] sm:$0xff]
    %v885 = vld [vmem:[%s875 + $0x48] sm:$0xff]
    %v886 = vld [vmem:[%s875 + $0x50] sm:$0xff]
    %v887 = vld [vmem:[%s875 + $0x58] sm:$0xff]
    %v888 = vld [vmem:[%s875 + $0x60] sm:$0xff]
    %v889 = vld [vmem:[%s875 + $0x68] sm:$0xff]
    %v890 = vld [vmem:[%s875 + $0x70] sm:$0xff]
    %v891 = vld [vmem:[%s875 + $0x78] sm:$0xff]
    %s892 = scalar_lea.vmem [#allocation13], 12
    %v893 = vld [vmem:[%s892] sm:$0x1]
    %v895 = vperm.slane %v893, 0
    %897 = vmatpush.msra.mxu0 %v891
    %898 = vmatpush.msra.mxu0 %v890
    %899 = vmatpush.msra.mxu0 %v889
    %900 = vmatpush.msra.mxu0 %v888
    %901 = vmatpush.msra.mxu0 %v887
    %902 = vmatpush.msra.mxu0 %v886
    %903 = vmatpush.msra.mxu0 %v885
    %904 = vmatpush.msra.mxu0 %v884
    %905 = vmatpush.msra.mxu0 %v883
    %906 = vmatpush.msra.mxu0 %v882
    %907 = vmatpush.msra.mxu0 %v881
    %908 = vmatpush.msra.mxu0 %v880
    %909 = vmatpush.msra.mxu0 %v879
    %910 = vmatpush.msra.mxu0 %v878
    %911 = vmatpush.msra.mxu0 %v877
    %912 = vmatpush.msra.mxu0 %v876
    %913 = vmatmul.f32.gmra.mxu0 %v874
    %v914 = vpop.f32.mrf.mxu0
    %v915 = vadd.f32 %v895, %v914
    %916 = vdwg.mxu0
    %917 = vst [vmem:[#allocation15] sm:$0xff] %v915
    %918 = vmax.xlane.f32.xlu0 %v915
    %v919 = vpop.xlane.xlu0 %918
    %v920 = vsub.f32 %v915, %v919
    %v921 = vmul.f32 %v920, 1.442695
    %v922 = vpow.pop %v921
    %923 = vadd.xlane.f32.xlu0 %v922
    %v924 = vpop.xlane.xlu0 %923
    %v925 = vrcp.pop %v924
    %v926 = vmul.f32 %v924, %v925
    %v927 = vsub.f32 1.0, %v926
    %v928 = vmul.f32 %v925, %v927
    %v929 = vadd.f32 %v925, %v928
    %vm930 = vweird.f32 %v924
    %vm931 = vweird.f32 %v925
    %vm932 = vmor %vm930, %vm931
    %v933 = vsel %vm932, %v925, %v929
    %v934 = vand.u32 2147483647, %v924
    %vm935 = vcmp.eq.f32.partialorder %v934, 8.507059e+37
    %v936 = vand.u32 %v924, 2147483648
    %v937 = vor.u32 1.1754944e-38, %v936
    %v938 = vsel %vm935, %v937, %v933
    %v939 = vmul.f32 %v922, %v938
    %v940 = vsub.f32 0.0, %v939
    %s941 = scalar_lea.vmem [#allocation11], 1280
    %v942 = vld [vmem:[%s941] sm:$0xff]
    %v943 = vld [vmem:[%s941 + $0x8] sm:$0xff]
    %v944 = vld [vmem:[%s941 + $0x10] sm:$0xff]
    %v945 = vld [vmem:[%s941 + $0x18] sm:$0xff]
    %v946 = vld [vmem:[%s941 + $0x20] sm:$0xff]
    %v947 = vld [vmem:[%s941 + $0x28] sm:$0xff]
    %v948 = vld [vmem:[%s941 + $0x30] sm:$0xff]
    %v949 = vld [vmem:[%s941 + $0x38] sm:$0xff]
    %v950 = vld [vmem:[%s941 + $0x40] sm:$0xff]
    %v951 = vld [vmem:[%s941 + $0x48] sm:$0xff]
    %v952 = vld [vmem:[%s941 + $0x50] sm:$0xff]
    %v953 = vld [vmem:[%s941 + $0x58] sm:$0xff]
    %v954 = vld [vmem:[%s941 + $0x60] sm:$0xff]
    %v955 = vld [vmem:[%s941 + $0x68] sm:$0xff]
    %v956 = vld [vmem:[%s941 + $0x70] sm:$0xff]
    %v957 = vld [vmem:[%s941 + $0x78] sm:$0xff]
    %958 = vmatpush.msra.mxu0 %v957
    %959 = vmatpush.msra.mxu0 %v956
    %960 = vmatpush.msra.mxu0 %v955
    %961 = vmatpush.msra.mxu0 %v954
    %962 = vmatpush.msra.mxu0 %v953
    %963 = vmatpush.msra.mxu0 %v952
    %964 = vmatpush.msra.mxu0 %v951
    %965 = vmatpush.msra.mxu0 %v950
    %966 = vmatpush.msra.mxu0 %v949
    %967 = vmatpush.msra.mxu0 %v948
    %968 = vmatpush.msra.mxu0 %v947
    %969 = vmatpush.msra.mxu0 %v946
    %970 = vmatpush.msra.mxu0 %v945
    %971 = vmatpush.msra.mxu0 %v944
    %972 = vmatpush.msra.mxu0 %v943
    %973 = vmatpush.msra.mxu0 %v942
    %974 = vmatmul.f32.gmra.mxu0 %v940
    %v975 = vpop.f32.mrf.mxu0
    %v976 = vadd.f32 0.0, %v975
    %977 = vdwg.mxu0
    %vm978 = vcmp.gt.f32.partialorder %v872, 0.0
    %v979 = vsel %vm978, %v976, 0.0
    %s980 = scalar_lea.vmem [#allocation11], 1408
    %v981 = vld [vmem:[%s980] sm:$0xff]
    %v982 = vld [vmem:[%s980 + $0x8] sm:$0xff]
    %v983 = vld [vmem:[%s980 + $0x10] sm:$0xff]
    %v984 = vld [vmem:[%s980 + $0x18] sm:$0xff]
    %v985 = vld [vmem:[%s980 + $0x20] sm:$0xff]
    %v986 = vld [vmem:[%s980 + $0x28] sm:$0xff]
    %v987 = vld [vmem:[%s980 + $0x30] sm:$0xff]
    %v988 = vld [vmem:[%s980 + $0x38] sm:$0xff]
    %v989 = vld [vmem:[%s980 + $0x40] sm:$0xff]
    %v990 = vld [vmem:[%s980 + $0x48] sm:$0xff]
    %v991 = vld [vmem:[%s980 + $0x50] sm:$0xff]
    %v992 = vld [vmem:[%s980 + $0x58] sm:$0xff]
    %v993 = vld [vmem:[%s980 + $0x60] sm:$0xff]
    %v994 = vld [vmem:[%s980 + $0x68] sm:$0xff]
    %v995 = vld [vmem:[%s980 + $0x70] sm:$0xff]
    %v996 = vld [vmem:[%s980 + $0x78] sm:$0xff]
    %997 = vmatpush.msra.mxu0 %v996
    %998 = vmatpush.msra.mxu0 %v995
    %999 = vmatpush.msra.mxu0 %v994
    %1000 = vmatpush.msra.mxu0 %v993
    %1001 = vmatpush.msra.mxu0 %v992
    %1002 = vmatpush.msra.mxu0 %v991
    %1003 = vmatpush.msra.mxu0 %v990
    %1004 = vmatpush.msra.mxu0 %v989
    %1005 = vmatpush.msra.mxu0 %v988
    %1006 = vmatpush.msra.mxu0 %v987
    %1007 = vmatpush.msra.mxu0 %v986
    %1008 = vmatpush.msra.mxu0 %v985
    %1009 = vmatpush.msra.mxu0 %v984
    %1010 = vmatpush.msra.mxu0 %v983
    %1011 = vmatpush.msra.mxu0 %v982
    %1012 = vmatpush.msra.mxu0 %v981
    %1013 = vmatmul.f32.gmra.mxu0 %v979
    %v1014 = vpop.f32.mrf.mxu0
    %v1015 = vadd.f32 0.0, %v1014
    %1016 = vdwg.mxu0
    %vm1017 = vcmp.gt.f32.partialorder %v829, 0.0
    %v1018 = vsel %vm1017, %v1015, 0.0
    %s1019 = scalar_lea.vmem [#allocation11], 1536
    %v1020 = vld [vmem:[%s1019] sm:$0xff]
    %v1021 = vld [vmem:[%s1019 + $0x8] sm:$0xff]
    %v1022 = vld [vmem:[%s1019 + $0x10] sm:$0xff]
    %v1023 = vld [vmem:[%s1019 + $0x18] sm:$0xff]
    %v1024 = vld [vmem:[%s1019 + $0x20] sm:$0xff]
    %v1025 = vld [vmem:[%s1019 + $0x28] sm:$0xff]
    %v1026 = vld [vmem:[%s1019 + $0x30] sm:$0xff]
    %v1027 = vld [vmem:[%s1019 + $0x38] sm:$0xff]
    %v1028 = vld [vmem:[%s1019 + $0x40] sm:$0xff]
    %v1029 = vld [vmem:[%s1019 + $0x48] sm:$0xff]
    %v1030 = vld [vmem:[%s1019 + $0x50] sm:$0xff]
    %v1031 = vld [vmem:[%s1019 + $0x58] sm:$0xff]
    %v1032 = vld [vmem:[%s1019 + $0x60] sm:$0xff]
    %v1033 = vld [vmem:[%s1019 + $0x68] sm:$0xff]
    %v1034 = vld [vmem:[%s1019 + $0x70] sm:$0xff]
    %v1035 = vld [vmem:[%s1019 + $0x78] sm:$0xff]
    %1036 = vmatpush.msra.mxu0 %v1035
    %1037 = vmatpush.msra.mxu0 %v1034
    %1038 = vmatpush.msra.mxu0 %v1033
    %1039 = vmatpush.msra.mxu0 %v1032
    %1040 = vmatpush.msra.mxu0 %v1031
    %1041 = vmatpush.msra.mxu0 %v1030
    %1042 = vmatpush.msra.mxu0 %v1029
    %1043 = vmatpush.msra.mxu0 %v1028
    %1044 = vmatpush.msra.mxu0 %v1027
    %1045 = vmatpush.msra.mxu0 %v1026
    %1046 = vmatpush.msra.mxu0 %v1025
    %1047 = vmatpush.msra.mxu0 %v1024
    %1048 = vmatpush.msra.mxu0 %v1023
    %1049 = vmatpush.msra.mxu0 %v1022
    %1050 = vmatpush.msra.mxu0 %v1021
    %1051 = vmatpush.msra.mxu0 %v1020
    %1052 = vmatmul.f32.gmra.mxu0 %v1018
    %v1053 = vpop.f32.mrf.mxu0
    %v1054 = vadd.f32 0.0, %v1053
    %1055 = vdwg.mxu0
    %vm1056 = vcmp.gt.f32.partialorder %v786, 0.0
    %v1057 = vsel %vm1056, %v1054, 0.0
    %s1058 = scalar_lea.vmem [#allocation11], 1664
    %v1059 = vld [vmem:[%s1058] sm:$0xff]
    %v1060 = vld [vmem:[%s1058 + $0x8] sm:$0xff]
    %v1061 = vld [vmem:[%s1058 + $0x10] sm:$0xff]
    %v1062 = vld [vmem:[%s1058 + $0x18] sm:$0xff]
    %v1063 = vld [vmem:[%s1058 + $0x20] sm:$0xff]
    %v1064 = vld [vmem:[%s1058 + $0x28] sm:$0xff]
    %v1065 = vld [vmem:[%s1058 + $0x30] sm:$0xff]
    %v1066 = vld [vmem:[%s1058 + $0x38] sm:$0xff]
    %v1067 = vld [vmem:[%s1058 + $0x40] sm:$0xff]
    %v1068 = vld [vmem:[%s1058 + $0x48] sm:$0xff]
    %v1069 = vld [vmem:[%s1058 + $0x50] sm:$0xff]
    %v1070 = vld [vmem:[%s1058 + $0x58] sm:$0xff]
    %v1071 = vld [vmem:[%s1058 + $0x60] sm:$0xff]
    %v1072 = vld [vmem:[%s1058 + $0x68] sm:$0xff]
    %v1073 = vld [vmem:[%s1058 + $0x70] sm:$0xff]
    %v1074 = vld [vmem:[%s1058 + $0x78] sm:$0xff]
    %1075 = vmatpush.msra.mxu0 %v1074
    %1076 = vmatpush.msra.mxu0 %v1073
    %1077 = vmatpush.msra.mxu0 %v1072
    %1078 = vmatpush.msra.mxu0 %v1071
    %1079 = vmatpush.msra.mxu0 %v1070
    %1080 = vmatpush.msra.mxu0 %v1069
    %1081 = vmatpush.msra.mxu0 %v1068
    %1082 = vmatpush.msra.mxu0 %v1067
    %1083 = vmatpush.msra.mxu0 %v1066
    %1084 = vmatpush.msra.mxu0 %v1065
    %1085 = vmatpush.msra.mxu0 %v1064
    %1086 = vmatpush.msra.mxu0 %v1063
    %1087 = vmatpush.msra.mxu0 %v1062
    %1088 = vmatpush.msra.mxu0 %v1061
    %1089 = vmatpush.msra.mxu0 %v1060
    %1090 = vmatpush.msra.mxu0 %v1059
    %1091 = vmatmul.f32.gmra.mxu0 %v1057
    %v1092 = vpop.f32.mrf.mxu0
    %v1093 = vadd.f32 0.0, %v1092
    %1094 = vdwg.mxu0
    %v1095 = vmul.f32 %v1093, %v722
    %s1096 = scalar_lea.vmem [#allocation11], 1792
    %v1097 = vld [vmem:[%s1096] sm:$0xff]
    %v1098 = vld [vmem:[%s1096 + $0x8] sm:$0xff]
    %v1099 = vld [vmem:[%s1096 + $0x10] sm:$0xff]
    %v1100 = vld [vmem:[%s1096 + $0x18] sm:$0xff]
    %v1101 = vld [vmem:[%s1096 + $0x20] sm:$0xff]
    %v1102 = vld [vmem:[%s1096 + $0x28] sm:$0xff]
    %v1103 = vld [vmem:[%s1096 + $0x30] sm:$0xff]
    %v1104 = vld [vmem:[%s1096 + $0x38] sm:$0xff]
    %v1105 = vld [vmem:[%s1096 + $0x40] sm:$0xff]
    %v1106 = vld [vmem:[%s1096 + $0x48] sm:$0xff]
    %v1107 = vld [vmem:[%s1096 + $0x50] sm:$0xff]
    %v1108 = vld [vmem:[%s1096 + $0x58] sm:$0xff]
    %v1109 = vld [vmem:[%s1096 + $0x60] sm:$0xff]
    %v1110 = vld [vmem:[%s1096 + $0x68] sm:$0xff]
    %v1111 = vld [vmem:[%s1096 + $0x70] sm:$0xff]
    %v1112 = vld [vmem:[%s1096 + $0x78] sm:$0xff]
    %1113 = vmatpush.msra.mxu0 %v1112
    %1114 = vmatpush.msra.mxu0 %v1111
    %1115 = vmatpush.msra.mxu0 %v1110
    %1116 = vmatpush.msra.mxu0 %v1109
    %1117 = vmatpush.msra.mxu0 %v1108
    %1118 = vmatpush.msra.mxu0 %v1107
    %1119 = vmatpush.msra.mxu0 %v1106
    %1120 = vmatpush.msra.mxu0 %v1105
    %1121 = vmatpush.msra.mxu0 %v1104
    %1122 = vmatpush.msra.mxu0 %v1103
    %1123 = vmatpush.msra.mxu0 %v1102
    %1124 = vmatpush.msra.mxu0 %v1101
    %1125 = vmatpush.msra.mxu0 %v1100
    %1126 = vmatpush.msra.mxu0 %v1099
    %1127 = vmatpush.msra.mxu0 %v1098
    %1128 = vmatpush.msra.mxu0 %v1097
    %1129 = vmatmul.f32.gmra.mxu0 %v1095
    %v1130 = vpop.f32.mrf.mxu0
    %v1131 = vadd.f32 0.0, %v1130
    %1132 = vdwg.mxu0
    %vm1133 = vcmp.gt.f32.partialorder %v475, 0.0
    %v1134 = vsel %vm1133, %v1131, 0.0
    %s1135 = scalar_lea.vmem [#allocation11], 1920
    %v1136 = vld [vmem:[%s1135] sm:$0xff]
    %v1137 = vld [vmem:[%s1135 + $0x8] sm:$0xff]
    %v1138 = vld [vmem:[%s1135 + $0x10] sm:$0xff]
    %v1139 = vld [vmem:[%s1135 + $0x18] sm:$0xff]
    %v1140 = vld [vmem:[%s1135 + $0x20] sm:$0xff]
    %v1141 = vld [vmem:[%s1135 + $0x28] sm:$0xff]
    %v1142 = vld [vmem:[%s1135 + $0x30] sm:$0xff]
    %v1143 = vld [vmem:[%s1135 + $0x38] sm:$0xff]
    %v1144 = vld [vmem:[%s1135 + $0x40] sm:$0xff]
    %v1145 = vld [vmem:[%s1135 + $0x48] sm:$0xff]
    %v1146 = vld [vmem:[%s1135 + $0x50] sm:$0xff]
    %v1147 = vld [vmem:[%s1135 + $0x58] sm:$0xff]
    %v1148 = vld [vmem:[%s1135 + $0x60] sm:$0xff]
    %v1149 = vld [vmem:[%s1135 + $0x68] sm:$0xff]
    %v1150 = vld [vmem:[%s1135 + $0x70] sm:$0xff]
    %v1151 = vld [vmem:[%s1135 + $0x78] sm:$0xff]
    %1152 = vmatpush.msra.mxu0 %v1151
    %1153 = vmatpush.msra.mxu0 %v1150
    %1154 = vmatpush.msra.mxu0 %v1149
    %1155 = vmatpush.msra.mxu0 %v1148
    %1156 = vmatpush.msra.mxu0 %v1147
    %1157 = vmatpush.msra.mxu0 %v1146
    %1158 = vmatpush.msra.mxu0 %v1145
    %1159 = vmatpush.msra.mxu0 %v1144
    %1160 = vmatpush.msra.mxu0 %v1143
    %1161 = vmatpush.msra.mxu0 %v1142
    %1162 = vmatpush.msra.mxu0 %v1141
    %1163 = vmatpush.msra.mxu0 %v1140
    %1164 = vmatpush.msra.mxu0 %v1139
    %1165 = vmatpush.msra.mxu0 %v1138
    %1166 = vmatpush.msra.mxu0 %v1137
    %1167 = vmatpush.msra.mxu0 %v1136
    %1168 = vmatmul.f32.gmra.mxu0 %v1134
    %v1169 = vpop.f32.mrf.mxu0
    %v1170 = vadd.f32 0.0, %v1169
    %1171 = vdwg.mxu0
    %vm1172 = vcmp.gt.f32.partialorder %v432, 0.0
    %v1173 = vsel %vm1172, %v1170, 0.0
    %s1174 = scalar_lea.vmem [#allocation11], 2048
    %v1175 = vld [vmem:[%s1174] sm:$0xff]
    %v1176 = vld [vmem:[%s1174 + $0x8] sm:$0xff]
    %v1177 = vld [vmem:[%s1174 + $0x10] sm:$0xff]
    %v1178 = vld [vmem:[%s1174 + $0x18] sm:$0xff]
    %v1179 = vld [vmem:[%s1174 + $0x20] sm:$0xff]
    %v1180 = vld [vmem:[%s1174 + $0x28] sm:$0xff]
    %v1181 = vld [vmem:[%s1174 + $0x30] sm:$0xff]
    %v1182 = vld [vmem:[%s1174 + $0x38] sm:$0xff]
    %v1183 = vld [vmem:[%s1174 + $0x40] sm:$0xff]
    %v1184 = vld [vmem:[%s1174 + $0x48] sm:$0xff]
    %v1185 = vld [vmem:[%s1174 + $0x50] sm:$0xff]
    %v1186 = vld [vmem:[%s1174 + $0x58] sm:$0xff]
    %v1187 = vld [vmem:[%s1174 + $0x60] sm:$0xff]
    %v1188 = vld [vmem:[%s1174 + $0x68] sm:$0xff]
    %v1189 = vld [vmem:[%s1174 + $0x70] sm:$0xff]
    %v1190 = vld [vmem:[%s1174 + $0x78] sm:$0xff]
    %1191 = vmatpush.msra.mxu0 %v1190
    %1192 = vmatpush.msra.mxu0 %v1189
    %1193 = vmatpush.msra.mxu0 %v1188
    %1194 = vmatpush.msra.mxu0 %v1187
    %1195 = vmatpush.msra.mxu0 %v1186
    %1196 = vmatpush.msra.mxu0 %v1185
    %1197 = vmatpush.msra.mxu0 %v1184
    %1198 = vmatpush.msra.mxu0 %v1183
    %1199 = vmatpush.msra.mxu0 %v1182
    %1200 = vmatpush.msra.mxu0 %v1181
    %1201 = vmatpush.msra.mxu0 %v1180
    %1202 = vmatpush.msra.mxu0 %v1179
    %1203 = vmatpush.msra.mxu0 %v1178
    %1204 = vmatpush.msra.mxu0 %v1177
    %1205 = vmatpush.msra.mxu0 %v1176
    %1206 = vmatpush.msra.mxu0 %v1175
    %1207 = vmatmul.f32.gmra.mxu0 %v1173
    %v1208 = vpop.f32.mrf.mxu0
    %v1209 = vadd.f32 0.0, %v1208
    %1210 = vdwg.mxu0
    %vm1211 = vcmp.gt.f32.partialorder %v390, 0.0
    %v1212 = vsel %vm1211, %v1209, 0.0
    %v1213 = vld [vmem:[#allocation7] sm:$0xff]
    %v1214 = vld [vmem:[#allocation7 + $0x8] sm:$0xff]
    %v1215 = vld [vmem:[#allocation7 + $0x10] sm:$0xff]
    %v1216 = vld [vmem:[#allocation7 + $0x18] sm:$0xff]
    %v1217 = vld [vmem:[#allocation7 + $0x20] sm:$0xff]
    %v1218 = vld [vmem:[#allocation7 + $0x28] sm:$0xff]
    %v1219 = vld [vmem:[#allocation7 + $0x30] sm:$0xff]
    %v1220 = vld [vmem:[#allocation7 + $0x38] sm:$0xff]
    %v1221 = vld [vmem:[#allocation7 + $0x40] sm:$0xff]
    %v1222 = vld [vmem:[#allocation7 + $0x48] sm:$0xff]
    %v1223 = vld [vmem:[#allocation7 + $0x50] sm:$0xff]
    %v1224 = vld [vmem:[#allocation7 + $0x58] sm:$0xff]
    %v1225 = vld [vmem:[#allocation7 + $0x60] sm:$0xff]
    %v1226 = vld [vmem:[#allocation7 + $0x68] sm:$0xff]
    %v1227 = vld [vmem:[#allocation7 + $0x70] sm:$0xff]
    %v1228 = vld [vmem:[#allocation7 + $0x78] sm:$0xff]
    %v1229 = vld [vmem:[#allocation7 + $0x80] sm:$0xff]
    %v1230 = vld [vmem:[#allocation7 + $0x88] sm:$0xff]
    %v1231 = vld [vmem:[#allocation7 + $0x90] sm:$0xff]
    %v1232 = vld [vmem:[#allocation7 + $0x98] sm:$0xff]
    %v1233 = vld [vmem:[#allocation7 + $0xa0] sm:$0xff]
    %v1234 = vld [vmem:[#allocation7 + $0xa8] sm:$0xff]
    %v1235 = vld [vmem:[#allocation7 + $0xb0] sm:$0xff]
    %v1236 = vld [vmem:[#allocation7 + $0xb8] sm:$0xff]
    %v1237 = vld [vmem:[#allocation7 + $0xc0] sm:$0xff]
    %v1238 = vld [vmem:[#allocation7 + $0xc8] sm:$0xff]
    %v1239 = vld [vmem:[#allocation7 + $0xd0] sm:$0xff]
    %v1240 = vld [vmem:[#allocation7 + $0xd8] sm:$0xff]
    %v1241 = vld [vmem:[#allocation7 + $0xe0] sm:$0xff]
    %v1242 = vld [vmem:[#allocation7 + $0xe8] sm:$0xff]
    %v1243 = vld [vmem:[#allocation7 + $0xf0] sm:$0xff]
    %v1244 = vld [vmem:[#allocation7 + $0xf8] sm:$0xff]
    %v1245 = vld [vmem:[#allocation7 + $0x100] sm:$0xff]
    %v1246 = vld [vmem:[#allocation7 + $0x108] sm:$0xff]
    %v1247 = vld [vmem:[#allocation7 + $0x110] sm:$0xff]
    %v1248 = vld [vmem:[#allocation7 + $0x118] sm:$0xff]
    %v1249 = vld [vmem:[#allocation7 + $0x120] sm:$0xff]
    %v1250 = vld [vmem:[#allocation7 + $0x128] sm:$0xff]
    %v1251 = vld [vmem:[#allocation7 + $0x130] sm:$0xff]
    %v1252 = vld [vmem:[#allocation7 + $0x138] sm:$0xff]
    %v1253 = vld [vmem:[#allocation7 + $0x140] sm:$0xff]
    %v1254 = vld [vmem:[#allocation7 + $0x148] sm:$0xff]
    %v1255 = vld [vmem:[#allocation7 + $0x150] sm:$0xff]
    %v1256 = vld [vmem:[#allocation7 + $0x158] sm:$0xff]
    %v1257 = vld [vmem:[#allocation7 + $0x160] sm:$0xff]
    %v1258 = vld [vmem:[#allocation7 + $0x168] sm:$0xff]
    %v1259 = vld [vmem:[#allocation7 + $0x170] sm:$0xff]
    %v1260 = vld [vmem:[#allocation7 + $0x178] sm:$0xff]
    %v1261 = vld [vmem:[#allocation7 + $0x180] sm:$0xff]
    %v1262 = vld [vmem:[#allocation7 + $0x188] sm:$0xff]
    %v1263 = vld [vmem:[#allocation7 + $0x190] sm:$0xff]
    %v1264 = vld [vmem:[#allocation7 + $0x198] sm:$0xff]
    %v1265 = vld [vmem:[#allocation7 + $0x1a0] sm:$0xff]
    %v1266 = vld [vmem:[#allocation7 + $0x1a8] sm:$0xff]
    %v1267 = vld [vmem:[#allocation7 + $0x1b0] sm:$0xff]
    %v1268 = vld [vmem:[#allocation7 + $0x1b8] sm:$0xff]
    %v1269 = vld [vmem:[#allocation7 + $0x1c0] sm:$0xff]
    %v1270 = vld [vmem:[#allocation7 + $0x1c8] sm:$0xff]
    %v1271 = vld [vmem:[#allocation7 + $0x1d0] sm:$0xff]
    %v1272 = vld [vmem:[#allocation7 + $0x1d8] sm:$0xff]
    %v1273 = vld [vmem:[#allocation7 + $0x1e0] sm:$0xff]
    %v1274 = vld [vmem:[#allocation7 + $0x1e8] sm:$0xff]
    %v1275 = vld [vmem:[#allocation7 + $0x1f0] sm:$0xff]
    %v1276 = vld [vmem:[#allocation7 + $0x1f8] sm:$0xff]
    %v1277 = vld [vmem:[#allocation7 + $0x200] sm:$0xff]
    %v1278 = vld [vmem:[#allocation7 + $0x208] sm:$0xff]
    %v1279 = vld [vmem:[#allocation7 + $0x210] sm:$0xff]
    %v1280 = vld [vmem:[#allocation7 + $0x218] sm:$0xff]
    %v1281 = vld [vmem:[#allocation7 + $0x220] sm:$0xff]
    %v1282 = vld [vmem:[#allocation7 + $0x228] sm:$0xff]
    %v1283 = vld [vmem:[#allocation7 + $0x230] sm:$0xff]
    %v1284 = vld [vmem:[#allocation7 + $0x238] sm:$0xff]
    %v1285 = vld [vmem:[#allocation7 + $0x240] sm:$0xff]
    %v1286 = vld [vmem:[#allocation7 + $0x248] sm:$0xff]
    %v1287 = vld [vmem:[#allocation7 + $0x250] sm:$0xff]
    %v1288 = vld [vmem:[#allocation7 + $0x258] sm:$0xff]
    %v1289 = vld [vmem:[#allocation7 + $0x260] sm:$0xff]
    %v1290 = vld [vmem:[#allocation7 + $0x268] sm:$0xff]
    %v1291 = vld [vmem:[#allocation7 + $0x270] sm:$0xff]
    %v1292 = vld [vmem:[#allocation7 + $0x278] sm:$0xff]
    %v1293 = vld [vmem:[#allocation7 + $0x280] sm:$0xff]
    %v1294 = vld [vmem:[#allocation7 + $0x288] sm:$0xff]
    %v1295 = vld [vmem:[#allocation7 + $0x290] sm:$0xff]
    %v1296 = vld [vmem:[#allocation7 + $0x298] sm:$0xff]
    %v1297 = vld [vmem:[#allocation7 + $0x2a0] sm:$0xff]
    %v1298 = vld [vmem:[#allocation7 + $0x2a8] sm:$0xff]
    %v1299 = vld [vmem:[#allocation7 + $0x2b0] sm:$0xff]
    %v1300 = vld [vmem:[#allocation7 + $0x2b8] sm:$0xff]
    %v1301 = vld [vmem:[#allocation7 + $0x2c0] sm:$0xff]
    %v1302 = vld [vmem:[#allocation7 + $0x2c8] sm:$0xff]
    %v1303 = vld [vmem:[#allocation7 + $0x2d0] sm:$0xff]
    %v1304 = vld [vmem:[#allocation7 + $0x2d8] sm:$0xff]
    %v1305 = vld [vmem:[#allocation7 + $0x2e0] sm:$0xff]
    %v1306 = vld [vmem:[#allocation7 + $0x2e8] sm:$0xff]
    %v1307 = vld [vmem:[#allocation7 + $0x2f0] sm:$0xff]
    %v1308 = vld [vmem:[#allocation7 + $0x2f8] sm:$0xff]
    %v1309 = vld [vmem:[#allocation7 + $0x300] sm:$0xff]
    %v1310 = vld [vmem:[#allocation7 + $0x308] sm:$0xff]
    %v1311 = vld [vmem:[#allocation7 + $0x310] sm:$0xff]
    %v1312 = vld [vmem:[#allocation7 + $0x318] sm:$0xff]
    %v1313 = vld [vmem:[#allocation7 + $0x320] sm:$0xff]
    %v1314 = vld [vmem:[#allocation7 + $0x328] sm:$0xff]
    %v1315 = vld [vmem:[#allocation7 + $0x330] sm:$0xff]
    %v1316 = vld [vmem:[#allocation7 + $0x338] sm:$0xff]
    %v1317 = vld [vmem:[#allocation7 + $0x340] sm:$0xff]
    %v1318 = vld [vmem:[#allocation7 + $0x348] sm:$0xff]
    %v1319 = vld [vmem:[#allocation7 + $0x350] sm:$0xff]
    %v1320 = vld [vmem:[#allocation7 + $0x358] sm:$0xff]
    %v1321 = vld [vmem:[#allocation7 + $0x360] sm:$0xff]
    %v1322 = vld [vmem:[#allocation7 + $0x368] sm:$0xff]
    %v1323 = vld [vmem:[#allocation7 + $0x370] sm:$0xff]
    %v1324 = vld [vmem:[#allocation7 + $0x378] sm:$0xff]
    %1325 = vmatpush.msra.mxu0 %v1318
    %1326 = vmatpush.msra.mxu0 %v1311
    %1327 = vmatpush.msra.mxu0 %v1304
    %1328 = vmatpush.msra.mxu0 %v1297
    %1329 = vmatpush.msra.mxu0 %v1290
    %1330 = vmatpush.msra.mxu0 %v1283
    %1331 = vmatpush.msra.mxu0 %v1276
    %1332 = vmatpush.msra.mxu0 %v1269
    %1333 = vmatpush.msra.mxu0 %v1262
    %1334 = vmatpush.msra.mxu0 %v1255
    %1335 = vmatpush.msra.mxu0 %v1248
    %1336 = vmatpush.msra.mxu0 %v1241
    %1337 = vmatpush.msra.mxu0 %v1234
    %1338 = vmatpush.msra.mxu0 %v1227
    %1339 = vmatpush.msra.mxu0 %v1220
    %1340 = vmatpush.msra.mxu0 %v1213
    %1341 = vmatmul.f32.gmra.mxu0 %v1212
    %v1342 = vpop.f32.mrf.mxu0
    %v1343 = vadd.f32 0.0, %v1342
    %1344 = vdwg.mxu0
    %1345 = vmatpush.msra.mxu0 %v1319
    %1346 = vmatpush.msra.mxu0 %v1312
    %1347 = vmatpush.msra.mxu0 %v1305
    %1348 = vmatpush.msra.mxu0 %v1298
    %1349 = vmatpush.msra.mxu0 %v1291
    %1350 = vmatpush.msra.mxu0 %v1284
    %1351 = vmatpush.msra.mxu0 %v1277
    %1352 = vmatpush.msra.mxu0 %v1270
    %1353 = vmatpush.msra.mxu0 %v1263
    %1354 = vmatpush.msra.mxu0 %v1256
    %1355 = vmatpush.msra.mxu0 %v1249
    %1356 = vmatpush.msra.mxu0 %v1242
    %1357 = vmatpush.msra.mxu0 %v1235
    %1358 = vmatpush.msra.mxu0 %v1228
    %1359 = vmatpush.msra.mxu0 %v1221
    %1360 = vmatpush.msra.mxu0 %v1214
    %1361 = vmatmul.f32.gmra.mxu0 %v1212
    %v1362 = vpop.f32.mrf.mxu0
    %v1363 = vadd.f32 0.0, %v1362
    %1364 = vdwg.mxu0
    %1365 = vmatpush.msra.mxu0 %v1320
    %1366 = vmatpush.msra.mxu0 %v1313
    %1367 = vmatpush.msra.mxu0 %v1306
    %1368 = vmatpush.msra.mxu0 %v1299
    %1369 = vmatpush.msra.mxu0 %v1292
    %1370 = vmatpush.msra.mxu0 %v1285
    %1371 = vmatpush.msra.mxu0 %v1278
    %1372 = vmatpush.msra.mxu0 %v1271
    %1373 = vmatpush.msra.mxu0 %v1264
    %1374 = vmatpush.msra.mxu0 %v1257
    %1375 = vmatpush.msra.mxu0 %v1250
    %1376 = vmatpush.msra.mxu0 %v1243
    %1377 = vmatpush.msra.mxu0 %v1236
    %1378 = vmatpush.msra.mxu0 %v1229
    %1379 = vmatpush.msra.mxu0 %v1222
    %1380 = vmatpush.msra.mxu0 %v1215
    %1381 = vmatmul.f32.gmra.mxu0 %v1212
    %v1382 = vpop.f32.mrf.mxu0
    %v1383 = vadd.f32 0.0, %v1382
    %1384 = vdwg.mxu0
    %1385 = vmatpush.msra.mxu0 %v1321
    %1386 = vmatpush.msra.mxu0 %v1314
    %1387 = vmatpush.msra.mxu0 %v1307
    %1388 = vmatpush.msra.mxu0 %v1300
    %1389 = vmatpush.msra.mxu0 %v1293
    %1390 = vmatpush.msra.mxu0 %v1286
    %1391 = vmatpush.msra.mxu0 %v1279
    %1392 = vmatpush.msra.mxu0 %v1272
    %1393 = vmatpush.msra.mxu0 %v1265
    %1394 = vmatpush.msra.mxu0 %v1258
    %1395 = vmatpush.msra.mxu0 %v1251
    %1396 = vmatpush.msra.mxu0 %v1244
    %1397 = vmatpush.msra.mxu0 %v1237
    %1398 = vmatpush.msra.mxu0 %v1230
    %1399 = vmatpush.msra.mxu0 %v1223
    %1400 = vmatpush.msra.mxu0 %v1216
    %1401 = vmatmul.f32.gmra.mxu0 %v1212
    %v1402 = vpop.f32.mrf.mxu0
    %v1403 = vadd.f32 0.0, %v1402
    %1404 = vdwg.mxu0
    %1405 = vmatpush.msra.mxu0 %v1322
    %1406 = vmatpush.msra.mxu0 %v1315
    %1407 = vmatpush.msra.mxu0 %v1308
    %1408 = vmatpush.msra.mxu0 %v1301
    %1409 = vmatpush.msra.mxu0 %v1294
    %1410 = vmatpush.msra.mxu0 %v1287
    %1411 = vmatpush.msra.mxu0 %v1280
    %1412 = vmatpush.msra.mxu0 %v1273
    %1413 = vmatpush.msra.mxu0 %v1266
    %1414 = vmatpush.msra.mxu0 %v1259
    %1415 = vmatpush.msra.mxu0 %v1252
    %1416 = vmatpush.msra.mxu0 %v1245
    %1417 = vmatpush.msra.mxu0 %v1238
    %1418 = vmatpush.msra.mxu0 %v1231
    %1419 = vmatpush.msra.mxu0 %v1224
    %1420 = vmatpush.msra.mxu0 %v1217
    %1421 = vmatmul.f32.gmra.mxu0 %v1212
    %v1422 = vpop.f32.mrf.mxu0
    %v1423 = vadd.f32 0.0, %v1422
    %1424 = vdwg.mxu0
    %1425 = vmatpush.msra.mxu0 %v1323
    %1426 = vmatpush.msra.mxu0 %v1316
    %1427 = vmatpush.msra.mxu0 %v1309
    %1428 = vmatpush.msra.mxu0 %v1302
    %1429 = vmatpush.msra.mxu0 %v1295
    %1430 = vmatpush.msra.mxu0 %v1288
    %1431 = vmatpush.msra.mxu0 %v1281
    %1432 = vmatpush.msra.mxu0 %v1274
    %1433 = vmatpush.msra.mxu0 %v1267
    %1434 = vmatpush.msra.mxu0 %v1260
    %1435 = vmatpush.msra.mxu0 %v1253
    %1436 = vmatpush.msra.mxu0 %v1246
    %1437 = vmatpush.msra.mxu0 %v1239
    %1438 = vmatpush.msra.mxu0 %v1232
    %1439 = vmatpush.msra.mxu0 %v1225
    %1440 = vmatpush.msra.mxu0 %v1218
    %1441 = vmatmul.f32.gmra.mxu0 %v1212
    %v1442 = vpop.f32.mrf.mxu0
    %v1443 = vadd.f32 0.0, %v1442
    %1444 = vdwg.mxu0
    %1445 = vmatpush.msra.mxu0 %v1324
    %1446 = vmatpush.msra.mxu0 %v1317
    %1447 = vmatpush.msra.mxu0 %v1310
    %1448 = vmatpush.msra.mxu0 %v1303
    %1449 = vmatpush.msra.mxu0 %v1296
    %1450 = vmatpush.msra.mxu0 %v1289
    %1451 = vmatpush.msra.mxu0 %v1282
    %1452 = vmatpush.msra.mxu0 %v1275
    %1453 = vmatpush.msra.mxu0 %v1268
    %1454 = vmatpush.msra.mxu0 %v1261
    %1455 = vmatpush.msra.mxu0 %v1254
    %1456 = vmatpush.msra.mxu0 %v1247
    %1457 = vmatpush.msra.mxu0 %v1240
    %1458 = vmatpush.msra.mxu0 %v1233
    %1459 = vmatpush.msra.mxu0 %v1226
    %1460 = vmatpush.msra.mxu0 %v1219
    %1461 = vmatmul.f32.gmra.mxu0 %v1212
    %v1462 = vpop.f32.mrf.mxu0
    %v1463 = vadd.f32 0.0, %v1462
    %1464 = vdwg.mxu0
    %1465 = vst [vmem:[#allocation14] sm:$0xff] %v1343
    %1466 = vst [vmem:[#allocation14 + $0x8] sm:$0xff] %v1363
    %1467 = vst [vmem:[#allocation14 + $0x10] sm:$0xff] %v1383
    %1468 = vst [vmem:[#allocation14 + $0x18] sm:$0xff] %v1403
    %1469 = vst [vmem:[#allocation14 + $0x20] sm:$0xff] %v1423
    %1470 = vst [vmem:[#allocation14 + $0x28] sm:$0xff] %v1443
    %1471 = vst [vmem:[#allocation14 + $0x30] sm:$0xff] %v1463
    // Predicated region
    $region62: #{tpu_custom_call.1} parent=1 // pred_check
      _
    $region63: #{tpu_custom_call.1} parent=1 // pred_check_branch
      %1473 = sbr.rel (0) target = $region65
    $region64: #{tpu_custom_call.1} parent=1 // pred_region
      %1475 = vsyncadd [#allocation4], 0
      %s1477 = sshll.u32 [#allocation14], 4
      %s1478 = int_to_ptr.vmem [resolvable:$true] %s1477
      %s1479 = sshll.u32 %s8, 4
      %s1480 = int_to_ptr.hbm [resolvable:$true] %s1479
      %1482 = dma.vmem_to_hbm [thread:$0]  %s1478, 896, %s1480, [#allocation4]
    $region65: #{tpu_custom_call.1} parent=1 // pred_fallthru
      _
    // Predicated region
    $region66: #{tpu_custom_call.1} parent=1 // pred_check
      _
    $region67: #{tpu_custom_call.1} parent=1 // pred_check_branch
      %1484 = sbr.rel (0) target = $region69
    $region68: #{tpu_custom_call.1} parent=1 // pred_region
      %1486 = vsyncadd [#allocation16], 0
      %s1488 = sshll.u32 [#allocation15], 4
      %s1489 = int_to_ptr.vmem [resolvable:$true] %s1488
      %s1490 = sshll.u32 %s9, 4
      %s1491 = int_to_ptr.hbm [resolvable:$true] %s1490
      %1493 = dma.vmem_to_hbm [thread:$0]  %s1489, 128, %s1491, [#allocation16]
    $region69: #{tpu_custom_call.1} parent=1 // pred_fallthru
      _
    // Predicated region
    $region70: #{tpu_custom_call.1} parent=1 // pred_check
      _
    $region71: #{tpu_custom_call.1} parent=1 // pred_check_branch
      %1495 = sbr.rel (0) target = $region73
    $region72: #{tpu_custom_call.1} parent=1 // pred_region
      %1497 = dma.done [#allocation4], 896
    $region73: #{tpu_custom_call.1} parent=1 // pred_fallthru
      _
    // Predicated region
    $region74: #{tpu_custom_call.1} parent=1 // pred_check
      _
    $region75: #{tpu_custom_call.1} parent=1 // pred_check_branch
      %1499 = sbr.rel (0) target = $region77
    $region76: #{tpu_custom_call.1} parent=1 // pred_region
      %1501 = dma.done [#allocation16], 128
    $region77: #{tpu_custom_call.1} parent=1 // pred_fallthru
      _
    %1502 = vsyncpa [#allocation3], 1
    %1503 = vsyncpa [#allocation6], 1
    %1504 = vsyncpa [#allocation9], 1
    %1505 = vsyncpa [#allocation12], 1
    %1506 = vsyncpa [#allocation4], 1
    %1507 = vsyncpa [#allocation16], 1

</llo_original>
